<compile_context>
chip_gen: v5e
topology: v5e:2x2
jax: 0.10.0
libtpu: 0.0.40
codegen_flags: <defaults>
</compile_context>

<pallas_src>
import functools

import jax
import jax.numpy as jnp
from jax import lax
from jax.experimental import pallas as pl
from jax.experimental.pallas import tpu as pltpu

K = 7
PAD = (K - 1) // 2


def _round_up(v, m):
    return (v + m - 1) // m * m


def _largest_divisor_at_most(n, cap):
    cap = max(1, min(n, int(cap)))
    for d in range(cap, 0, -1):
        if n % d == 0:
            return d
    return 1


def _pick_channel_chunk(C, cap):
    """Largest divisor of C that is a multiple of 8 and <= cap; else the
    smallest multiple-of-8 divisor; else C (single chunk, small-C fallback)."""
    mult8 = [d for d in range(8, C + 1, 8) if C % d == 0]
    fitting = [d for d in mult8 if d <= cap]
    if fitting:
        return max(fitting)
    if mult8:
        return min(mult8)
    return C


def _vmem_capacity_bytes():
    try:
        return int(pltpu.get_tpu_info().vmem_capacity_bytes)
    except Exception:
        return 64 * 1024 * 1024  # conservative: v7x per-core VMEM


def _conv_sigmoid(cmax, csum, w_ref, b_ref, H, W):
    """7x7 conv (2->1 ch, pad=3) + folded BN bias + sigmoid on flat pooled maps.

    cmax / csum : (nb, H*W) f32.  csum is the raw channel sum; 1/C is already
    folded into the 'mean' half of w_ref.  Returns (nb, H*W) f32.
    """
    nb, HW = cmax.shape
    lpad = _round_up(PAD * W + PAD, 128)
    zpad = jnp.zeros((nb, lpad), jnp.float32)
    cmax_p = jnp.concatenate([zpad, cmax, zpad], axis=1)   # (nb, HW + 2*lpad)
    csum_p = jnp.concatenate([zpad, csum, zpad], axis=1)

    # Column index w = p mod W, exact in f32 while H*W < 2**22 (guarded in
    # the wrapper).  Avoids vector integer remainder.
    pos = lax.broadcasted_iota(jnp.int32, (nb, HW), 1).astype(jnp.float32)
    col = pos - jnp.floor(pos / float(W)) * float(W)

    # tap(dh, dw)[p] = pooled[p + dh*W + dw]; flat zero padding makes the
    # top/bottom border correct, the per-dw column mask fixes left/right.
    acc = jnp.full((nb, HW), b_ref[0], dtype=jnp.float32)
    for dw in range(-PAD, PAD + 1):
        kw = dw + PAD
        inner = jnp.zeros((nb, HW), jnp.float32)
        for dh in range(-PAD, PAD + 1):
            kh = dh + PAD
            start = lpad + dh * W + dw
            tap_max = lax.slice(cmax_p, (0, start), (nb, start + HW))
            tap_sum = lax.slice(csum_p, (0, start), (nb, start + HW))
            inner = (inner
                     + w_ref[kh * K + kw] * tap_max
                     + w_ref[K * K + kh * K + kw] * tap_sum)
        if dw == 0:
            acc = acc + inner
        else:
            cpd = col + float(dw)
            ok = jnp.logical_and(cpd >= 0.0, cpd < float(W))
            acc = acc + jnp.where(ok, inner, 0.0)
    return jax.nn.sigmoid(acc)


# ----------------------------------------------------------------------------
# Small path: one fused kernel per batch block (sample(s) fit in VMEM).
# ----------------------------------------------------------------------------
def _fused_kernel(w_ref, b_ref, x_ref, o_ref, *, H, W, CC):
    """w_ref: SMEM (98,) f32; b_ref: SMEM (1,) f32; x_ref/o_ref: VMEM (nb,C,HW)."""
    nb, C, HW = x_ref.shape
    n_chunks = C // CC
    unroll = n_chunks <= 8

    # Pass 1: channel pooling by chunks (running max + f32 running sum) so we
    # never hold the whole block (nor an f32 copy of it) as live values.
    def pool_body(ci, carry):
        cmax, csum = carry
        xc = x_ref[:, pl.ds(ci * CC, CC), :].astype(jnp.float32)   # (nb,CC,HW)
        return (jnp.maximum(cmax, jnp.max(xc, axis=1)),
                csum + jnp.sum(xc, axis=1))

    cmax, csum = lax.fori_loop(
        0, n_chunks, pool_body,
        (jnp.full((nb, HW), -jnp.inf, jnp.float32),
         jnp.zeros((nb, HW), jnp.float32)),
        unroll=unroll)

    scale = _conv_sigmoid(cmax, csum, w_ref, b_ref, H, W)
    # Cast once; bf16 inputs keep half-width gating streams (documented
    # precision divergence vs the f32 reference multiply).
    scale_x = scale.astype(o_ref.dtype)

    # Pass 2: chunked gating multiply, stored straight to o_ref.
    def gate_body(ci, carry):
        sl = pl.ds(ci * CC, CC)
        o_ref[:, sl, :] = (x_ref[:, sl, :] * scale_x[:, None, :]).astype(o_ref.dtype)
        return carry

    lax.fori_loop(0, n_chunks, gate_body, 0, unroll=unroll)


# ----------------------------------------------------------------------------
# Large path: per-sample too big for VMEM -> two channel-blocked kernels.
# ----------------------------------------------------------------------------
def _pool_conv_kernel(w_ref, b_ref, x_ref, scale_ref, max_sc, sum_sc, *, H, W):
    """Accumulate channel max/sum across the channel grid axis, finalize with
    conv+sigmoid at the last channel step.  x_ref: (nb, cc, HW)."""
    ci = pl.program_id(1)

    @pl.when(ci == 0)
    def _():
        max_sc[...] = jnp.full_like(max_sc, -jnp.inf)
        sum_sc[...] = jnp.zeros_like(sum_sc)

    xc = x_ref[...].astype(jnp.float32)
    max_sc[...] = jnp.maximum(max_sc[...], jnp.max(xc, axis=1))
    sum_sc[...] = sum_sc[...] + jnp.sum(xc, axis=1)

    @pl.when(ci == pl.num_programs(1) - 1)
    def _():
        s = _conv_sigmoid(max_sc[...], sum_sc[...], w_ref, b_ref, H, W)
        scale_ref[...] = s[:, None, :]


def _gate_kernel(x_ref, scale_ref, o_ref):
    s = scale_ref[...].astype(o_ref.dtype)            # (nb, 1, HW)
    o_ref[...] = (x_ref[...] * s).astype(o_ref.dtype)


# ----------------------------------------------------------------------------
# Wrapper
# ----------------------------------------------------------------------------
def spatial_gate(x, conv_w, bn_gamma, bn_beta, bn_mean, bn_var, eps=1e-5,
                 *, force_big=False, small_chunk_c=None, big_chunk_c=None):
    """x: (N, C, H, W).  conv_w: (1, 2, 7, 7).  bn_*: (1,)."""
    N, C, H, W = x.shape
    HW = H * W
    assert HW < (1 << 22), "flat f32 column-index trick requires H*W < 2**22"

    # Fold BatchNorm (inference mode) into the conv weight / bias, and fold
    # 1/C into the 'mean' channel weights (kernel accumulates a plain sum).
    s = bn_gamma / jnp.sqrt(bn_var + eps)                        # (1,)
    w = (conv_w[0] * s[0]).astype(jnp.float32)                   # (2, 7, 7)
    w = w.at[1].multiply(1.0 / C)
    w_flat = w.reshape(-1)                                       # (98,)
    b_fold = (bn_beta - bn_mean * s).astype(jnp.float32)         # (1,)

    x_flat = x.reshape(N, C, HW)                                 # free reshape
    itemsize = x.dtype.itemsize
    per_sample = C * HW * itemsize

    # Per-chip VMEM budget: 75% of physical capacity; x/out blocks capped at
    # budget/8 (2x(in+out) double buffers + chunked kernel values fit easily).
    vmem_budget = int(0.75 * _vmem_capacity_bytes())
    block_cap = max(1, vmem_budget // 8)

    cost = pl.CostEstimate(
        flops=int(N * HW * (3 * C + 4 * K * K + 8)),
        transcendentals=int(N * HW),
        bytes_accessed=int(3 * N * C * HW * itemsize))

    use_big = force_big or per_sample > block_cap

    if not use_big:
        # ---- small path: one fused kernel, batch-blocked grid -------------
        # Keep >=2 (ideally >=4) grid steps when N >= 2 so v7x uses both TCs.
        min_steps = min(4, N)
        nb_cap = max(1, min(block_cap // max(per_sample, 1), N // min_steps))
        nb = _largest_divisor_at_most(N, nb_cap)

        if small_chunk_c is not None:
            assert C % small_chunk_c == 0
            CC = small_chunk_c
        else:
            cc_cap = max(1, (1 << 20) // max(nb * HW * 4, 1))    # ~1 MiB values
            CC = _pick_channel_chunk(C, cc_cap)

        kernel = functools.partial(_fused_kernel, H=H, W=W, CC=CC)
        out_flat = pl.pallas_call(
            kernel,
            out_shape=jax.ShapeDtypeStruct((N, C, HW), x.dtype),
            grid_spec=pltpu.PrefetchScalarGridSpec(
                num_scalar_prefetch=2,                 # w_flat, b_fold -> SMEM
                grid=(N // nb,),
                in_specs=[pl.BlockSpec((nb, C, HW), lambda n, w, b: (n, 0, 0))],
                out_specs=pl.BlockSpec((nb, C, HW), lambda n, w, b: (n, 0, 0)),
            ),
            compiler_params=pltpu.CompilerParams(
                dimension_semantics=("parallel",),
                vmem_limit_bytes=vmem_budget),
            cost_estimate=cost,
        )(w_flat, b_fold, x_flat)
        return out_flat.reshape(N, C, H, W)

    # ---- large path: channel-blocked, sample stays in HBM between passes ----
    nb = 1
    if big_chunk_c is not None:
        assert C % big_chunk_c == 0
        CC = big_chunk_c
    else:
        cc_cap = max(1, block_cap // max(HW * itemsize, 1))
        CC = _pick_channel_chunk(C, cc_cap)

    cost_pool = pl.CostEstimate(
        flops=int(N * HW * (3 * C + 4 * K * K)),
        transcendentals=int(N * HW),
        bytes_accessed=int(N * C * HW * itemsize + N * HW * 4))
    cost_gate = pl.CostEstimate(
        flops=int(N * C * HW),
        transcendentals=0,
        bytes_accessed=int(2 * N * C * HW * itemsize + N * HW * 4))

    pool_kernel = functools.partial(_pool_conv_kernel, H=H, W=W)
    scale = pl.pallas_call(
        pool_kernel,
        out_shape=jax.ShapeDtypeStruct((N, 1, HW), jnp.float32),
        grid_spec=pltpu.PrefetchScalarGridSpec(
            num_scalar_prefetch=2,
            grid=(N, C // CC),
            in_specs=[pl.BlockSpec((nb, CC, HW), lambda n, c, w, b: (n, c, 0))],
            out_specs=pl.BlockSpec((nb, 1, HW), lambda n, c, w, b: (n, 0, 0)),
            scratch_shapes=[pltpu.VMEM((nb, HW), jnp.float32),
                            pltpu.VMEM((nb, HW), jnp.float32)],
        ),
        compiler_params=pltpu.CompilerParams(
            dimension_semantics=("parallel", "arbitrary"),
            vmem_limit_bytes=vmem_budget),
        cost_estimate=cost_pool,
    )(w_flat, b_fold, x_flat)

    out_flat = pl.pallas_call(
        _gate_kernel,
        out_shape=jax.ShapeDtypeStruct((N, C, HW), x.dtype),
        grid_spec=pltpu.PrefetchScalarGridSpec(
            num_scalar_prefetch=0,
            grid=(N, C // CC),
            in_specs=[pl.BlockSpec((nb, CC, HW), lambda n, c: (n, c, 0)),
                      pl.BlockSpec((nb, 1, HW), lambda n, c: (n, 0, 0))],
            out_specs=pl.BlockSpec((nb, CC, HW), lambda n, c: (n, c, 0)),
        ),
        compiler_params=pltpu.CompilerParams(
            dimension_semantics=("parallel", "parallel"),
            vmem_limit_bytes=vmem_budget),
        cost_estimate=cost_gate,
    )(x_flat, scale)
    return out_flat.reshape(N, C, H, W)


def spatial_gate_reference(x, conv_w, bn_gamma, bn_beta, bn_mean, bn_var,
                           eps=1e-5):
    """Pure-JAX reference (mirrors the PyTorch forward, BN in eval mode)."""
    cmax = jnp.max(x, axis=1, keepdims=True)
    cmean = jnp.mean(x, axis=1, keepdims=True)
    comp = jnp.concatenate([cmax, cmean], axis=1)                # (N,2,H,W)
    y = lax.conv_general_dilated(
        comp, conv_w, window_strides=(1, 1), padding=((PAD, PAD), (PAD, PAD)),
        dimension_numbers=("NCHW", "OIHW", "NCHW"))              # (N,1,H,W)
    y = (y - bn_mean[None, :, None, None]) / jnp.sqrt(
        bn_var[None, :, None, None] + eps)
    y = y * bn_gamma[None, :, None, None] + bn_beta[None, :, None, None]
    return x * jax.nn.sigmoid(y)


if __name__ == "__main__":
    key = jax.random.PRNGKey(0)
    k_x, k_w, k_x2 = jax.random.split(key, 3)

    # Deterministic synthetic parameters (shapes from SpatialGate.__init__).
    conv_w = 0.1 * jax.random.normal(k_w, (1, 2, K, K), dtype=jnp.float32)
    bn_gamma = jnp.array([1.1], dtype=jnp.float32)
    bn_beta = jnp.array([0.05], dtype=jnp.float32)
    bn_mean = jnp.array([0.02], dtype=jnp.float32)
    bn_var = jnp.array([0.9], dtype=jnp.float32)
    params = (conv_w, bn_gamma, bn_beta, bn_mean, bn_var)

    def check(out, ref, atol, rtol):
        assert out.shape == ref.shape
        o = out.astype(jnp.float32)
        r = ref.astype(jnp.float32)
        assert jnp.allclose(o, r, atol=atol, rtol=rtol), (
            float(jnp.max(jnp.abs(o - r))))

    # 1) Small fused path, f32 (primary shape).
    x = jax.random.normal(k_x, (2, 4, 16, 16), dtype=jnp.float32)
    out = jax.block_until_ready(spatial_gate(x, *params))
    check(out, spatial_gate_reference(x, *params), 1e-5, 1e-5)

    # 2) Small fused path with the in-kernel channel chunking exercised.
    x2 = jax.random.normal(k_x2, (2, 16, 16, 16), dtype=jnp.float32)
    ref2 = spatial_gate_reference(x2, *params)
    out2 = jax.block_until_ready(spatial_gate(x2, *params, small_chunk_c=8))
    check(out2, ref2, 1e-5, 1e-5)

    # 3) Large (channel-blocked, two-kernel) path forced at small shapes.
    out3 = jax.block_until_ready(
        spatial_gate(x2, *params, force_big=True, big_chunk_c=8))
    check(out3, ref2, 1e-5, 1e-5)

    # 4) bf16 small path (scale applied in bf16 -> looser tolerance).
    xb = x2.astype(jnp.bfloat16)
    outb = jax.block_until_ready(spatial_gate(xb, *params))
    refb = spatial_gate_reference(xb.astype(jnp.float32), *params)
    check(outb, refb, 5e-2, 5e-2)

    print("KERNEL_OK")
</pallas_src>

<mosaic_0001>
module attributes {stable_mosaic.version = 11 : i64} {
  func.func @_fused_kernel(%arg0: i32, %arg1: memref<98xf32, #tpu.memory_space<smem>>, %arg2: memref<1xf32, #tpu.memory_space<smem>>, %arg3: memref<1x4x256xf32, #tpu.memory_space<vmem>>, %arg4: memref<1x4x256xf32, #tpu.memory_space<vmem>>) attributes {dimension_semantics = [#tpu.dimension_semantics<parallel>], iteration_bounds = array<i64: 2>, scalar_prefetch = 2 : i64, scratch_operands = 0 : i64, tpu.core_type = #tpu.core_type<tc>, window_params = [{transform_indices = @transform_0, window_bounds = array<i64: 1, 4, 256>}, {transform_indices = @transform_1, window_bounds = array<i64: 1, 4, 256>}]} {
    %cst = arith.constant 0xFF800000 : f32
    %0 = vector.broadcast %cst : f32 to vector<1x256xf32>
    %cst_0 = arith.constant 0.000000e+00 : f32
    %1 = vector.broadcast %cst_0 : f32 to vector<1x256xf32>
    %c0_i32 = arith.constant 0 : i32
    %c4_i32 = arith.constant 4 : i32
    %2 = arith.muli %c0_i32, %c4_i32 : i32
    %c0 = arith.constant 0 : index
    %3 = arith.index_cast %2 : i32 to index
    %c0_1 = arith.constant 0 : index
    %4 = vector.load %arg3[%c0, %3, %c0_1] : memref<1x4x256xf32, #tpu.memory_space<vmem>>, vector<1x4x256xf32>
    %cst_2 = arith.constant dense<0xFF800000> : vector<1x256xf32>
    %5 = vector.multi_reduction <maximumf>, %4, %cst_2 [1] : vector<1x4x256xf32> to vector<1x256xf32>
    %6 = arith.maximumf %0, %5 : vector<1x256xf32>
    %cst_3 = arith.constant dense<0.000000e+00> : vector<1x256xf32>
    %7 = vector.multi_reduction <add>, %4, %cst_3 [1] : vector<1x4x256xf32> to vector<1x256xf32>
    %8 = arith.addf %1, %7 : vector<1x256xf32>
    %c1_i32 = arith.constant 1 : i32
    %cst_4 = arith.constant 0.000000e+00 : f32
    %9 = vector.broadcast %cst_4 : f32 to vector<1x128xf32>
    %10 = tpu.concatenate %9, %6, %9 in 1 : vector<1x128xf32>, vector<1x256xf32>, vector<1x128xf32> -> vector<1x512xf32>
    %11 = tpu.concatenate %9, %8, %9 in 1 : vector<1x128xf32>, vector<1x256xf32>, vector<1x128xf32> -> vector<1x512xf32>
    %12 = tpu.iota {dimensions = array<i32: 1>} : vector<1x256xi32>
    %13 = arith.sitofp %12 : vector<1x256xi32> to vector<1x256xf32>
    %cst_5 = arith.constant 1.600000e+01 : f32
    %14 = vector.broadcast %cst_5 : f32 to vector<1x256xf32>
    %15 = arith.divf %13, %14 : vector<1x256xf32>
    %16 = math.floor %15 : vector<1x256xf32>
    %cst_6 = arith.constant 1.600000e+01 : f32
    %17 = vector.broadcast %cst_6 : f32 to vector<1x256xf32>
    %18 = arith.mulf %16, %17 : vector<1x256xf32>
    %19 = arith.subf %13, %18 : vector<1x256xf32>
    %c0_7 = arith.constant 0 : index
    %20 = memref.load %arg2[%c0_7] : memref<1xf32, #tpu.memory_space<smem>>
    %21 = vector.broadcast %20 : f32 to vector<1x256xf32>
    %cst_8 = arith.constant 0.000000e+00 : f32
    %22 = vector.broadcast %cst_8 : f32 to vector<1x256xf32>
    %23 = vector.extract_strided_slice %10 {offsets = [0, 77], sizes = [1, 256], strides = [1, 1]} : vector<1x512xf32> to vector<1x256xf32>
    %24 = vector.extract_strided_slice %11 {offsets = [0, 77], sizes = [1, 256], strides = [1, 1]} : vector<1x512xf32> to vector<1x256xf32>
    %c0_9 = arith.constant 0 : index
    %25 = memref.load %arg1[%c0_9] : memref<98xf32, #tpu.memory_space<smem>>
    %26 = vector.broadcast %25 : f32 to vector<1x256xf32>
    %27 = arith.mulf %26, %23 : vector<1x256xf32>
    %28 = arith.addf %22, %27 : vector<1x256xf32>
    %c49 = arith.constant 49 : index
    %29 = memref.load %arg1[%c49] : memref<98xf32, #tpu.memory_space<smem>>
    %30 = vector.broadcast %29 : f32 to vector<1x256xf32>
    %31 = arith.mulf %30, %24 : vector<1x256xf32>
    %32 = arith.addf %28, %31 : vector<1x256xf32>
    %33 = vector.extract_strided_slice %10 {offsets = [0, 93], sizes = [1, 256], strides = [1, 1]} : vector<1x512xf32> to vector<1x256xf32>
    %34 = vector.extract_strided_slice %11 {offsets = [0, 93], sizes = [1, 256], strides = [1, 1]} : vector<1x512xf32> to vector<1x256xf32>
    %c7 = arith.constant 7 : index
    %35 = memref.load %arg1[%c7] : memref<98xf32, #tpu.memory_space<smem>>
    %36 = vector.broadcast %35 : f32 to vector<1x256xf32>
    %37 = arith.mulf %36, %33 : vector<1x256xf32>
    %38 = arith.addf %32, %37 : vector<1x256xf32>
    %c56 = arith.constant 56 : index
    %39 = memref.load %arg1[%c56] : memref<98xf32, #tpu.memory_space<smem>>
    %40 = vector.broadcast %39 : f32 to vector<1x256xf32>
    %41 = arith.mulf %40, %34 : vector<1x256xf32>
    %42 = arith.addf %38, %41 : vector<1x256xf32>
    %43 = vector.extract_strided_slice %10 {offsets = [0, 109], sizes = [1, 256], strides = [1, 1]} : vector<1x512xf32> to vector<1x256xf32>
    %44 = vector.extract_strided_slice %11 {offsets = [0, 109], sizes = [1, 256], strides = [1, 1]} : vector<1x512xf32> to vector<1x256xf32>
    %c14 = arith.constant 14 : index
    %45 = memref.load %arg1[%c14] : memref<98xf32, #tpu.memory_space<smem>>
    %46 = vector.broadcast %45 : f32 to vector<1x256xf32>
    %47 = arith.mulf %46, %43 : vector<1x256xf32>
    %48 = arith.addf %42, %47 : vector<1x256xf32>
    %c63 = arith.constant 63 : index
    %49 = memref.load %arg1[%c63] : memref<98xf32, #tpu.memory_space<smem>>
    %50 = vector.broadcast %49 : f32 to vector<1x256xf32>
    %51 = arith.mulf %50, %44 : vector<1x256xf32>
    %52 = arith.addf %48, %51 : vector<1x256xf32>
    %53 = vector.extract_strided_slice %10 {offsets = [0, 125], sizes = [1, 256], strides = [1, 1]} : vector<1x512xf32> to vector<1x256xf32>
    %54 = vector.extract_strided_slice %11 {offsets = [0, 125], sizes = [1, 256], strides = [1, 1]} : vector<1x512xf32> to vector<1x256xf32>
    %c21 = arith.constant 21 : index
    %55 = memref.load %arg1[%c21] : memref<98xf32, #tpu.memory_space<smem>>
    %56 = vector.broadcast %55 : f32 to vector<1x256xf32>
    %57 = arith.mulf %56, %53 : vector<1x256xf32>
    %58 = arith.addf %52, %57 : vector<1x256xf32>
    %c70 = arith.constant 70 : index
    %59 = memref.load %arg1[%c70] : memref<98xf32, #tpu.memory_space<smem>>
    %60 = vector.broadcast %59 : f32 to vector<1x256xf32>
    %61 = arith.mulf %60, %54 : vector<1x256xf32>
    %62 = arith.addf %58, %61 : vector<1x256xf32>
    %63 = vector.extract_strided_slice %10 {offsets = [0, 141], sizes = [1, 256], strides = [1, 1]} : vector<1x512xf32> to vector<1x256xf32>
    %64 = vector.extract_strided_slice %11 {offsets = [0, 141], sizes = [1, 256], strides = [1, 1]} : vector<1x512xf32> to vector<1x256xf32>
    %c28 = arith.constant 28 : index
    %65 = memref.load %arg1[%c28] : memref<98xf32, #tpu.memory_space<smem>>
    %66 = vector.broadcast %65 : f32 to vector<1x256xf32>
    %67 = arith.mulf %66, %63 : vector<1x256xf32>
    %68 = arith.addf %62, %67 : vector<1x256xf32>
    %c77 = arith.constant 77 : index
    %69 = memref.load %arg1[%c77] : memref<98xf32, #tpu.memory_space<smem>>
    %70 = vector.broadcast %69 : f32 to vector<1x256xf32>
    %71 = arith.mulf %70, %64 : vector<1x256xf32>
    %72 = arith.addf %68, %71 : vector<1x256xf32>
    %73 = vector.extract_strided_slice %10 {offsets = [0, 157], sizes = [1, 256], strides = [1, 1]} : vector<1x512xf32> to vector<1x256xf32>
    %74 = vector.extract_strided_slice %11 {offsets = [0, 157], sizes = [1, 256], strides = [1, 1]} : vector<1x512xf32> to vector<1x256xf32>
    %c35 = arith.constant 35 : index
    %75 = memref.load %arg1[%c35] : memref<98xf32, #tpu.memory_space<smem>>
    %76 = vector.broadcast %75 : f32 to vector<1x256xf32>
    %77 = arith.mulf %76, %73 : vector<1x256xf32>
    %78 = arith.addf %72, %77 : vector<1x256xf32>
    %c84 = arith.constant 84 : index
    %79 = memref.load %arg1[%c84] : memref<98xf32, #tpu.memory_space<smem>>
    %80 = vector.broadcast %79 : f32 to vector<1x256xf32>
    %81 = arith.mulf %80, %74 : vector<1x256xf32>
    %82 = arith.addf %78, %81 : vector<1x256xf32>
    %83 = vector.extract_strided_slice %10 {offsets = [0, 173], sizes = [1, 256], strides = [1, 1]} : vector<1x512xf32> to vector<1x256xf32>
    %84 = vector.extract_strided_slice %11 {offsets = [0, 173], sizes = [1, 256], strides = [1, 1]} : vector<1x512xf32> to vector<1x256xf32>
    %c42 = arith.constant 42 : index
    %85 = memref.load %arg1[%c42] : memref<98xf32, #tpu.memory_space<smem>>
    %86 = vector.broadcast %85 : f32 to vector<1x256xf32>
    %87 = arith.mulf %86, %83 : vector<1x256xf32>
    %88 = arith.addf %82, %87 : vector<1x256xf32>
    %c91 = arith.constant 91 : index
    %89 = memref.load %arg1[%c91] : memref<98xf32, #tpu.memory_space<smem>>
    %90 = vector.broadcast %89 : f32 to vector<1x256xf32>
    %91 = arith.mulf %90, %84 : vector<1x256xf32>
    %92 = arith.addf %88, %91 : vector<1x256xf32>
    %cst_10 = arith.constant -3.000000e+00 : f32
    %93 = vector.broadcast %cst_10 : f32 to vector<1x256xf32>
    %94 = arith.addf %19, %93 : vector<1x256xf32>
    %cst_11 = arith.constant 0.000000e+00 : f32
    %95 = vector.broadcast %cst_11 : f32 to vector<1x256xf32>
    %96 = arith.cmpf oge, %94, %95 : vector<1x256xf32>
    %cst_12 = arith.constant 1.600000e+01 : f32
    %97 = vector.broadcast %cst_12 : f32 to vector<1x256xf32>
    %98 = arith.cmpf olt, %94, %97 : vector<1x256xf32>
    %99 = arith.andi %96, %98 : vector<1x256xi1>
    %cst_13 = arith.constant 0.000000e+00 : f32
    %100 = vector.broadcast %cst_13 : f32 to vector<1x256xf32>
    %101 = arith.select %99, %92, %100 : vector<1x256xi1>, vector<1x256xf32>
    %102 = arith.addf %21, %101 : vector<1x256xf32>
    %cst_14 = arith.constant 0.000000e+00 : f32
    %103 = vector.broadcast %cst_14 : f32 to vector<1x256xf32>
    %104 = vector.extract_strided_slice %10 {offsets = [0, 78], sizes = [1, 256], strides = [1, 1]} : vector<1x512xf32> to vector<1x256xf32>
    %105 = vector.extract_strided_slice %11 {offsets = [0, 78], sizes = [1, 256], strides = [1, 1]} : vector<1x512xf32> to vector<1x256xf32>
    %c1 = arith.constant 1 : index
    %106 = memref.load %arg1[%c1] : memref<98xf32, #tpu.memory_space<smem>>
    %107 = vector.broadcast %106 : f32 to vector<1x256xf32>
    %108 = arith.mulf %107, %104 : vector<1x256xf32>
    %109 = arith.addf %103, %108 : vector<1x256xf32>
    %c50 = arith.constant 50 : index
    %110 = memref.load %arg1[%c50] : memref<98xf32, #tpu.memory_space<smem>>
    %111 = vector.broadcast %110 : f32 to vector<1x256xf32>
    %112 = arith.mulf %111, %105 : vector<1x256xf32>
    %113 = arith.addf %109, %112 : vector<1x256xf32>
    %114 = vector.extract_strided_slice %10 {offsets = [0, 94], sizes = [1, 256], strides = [1, 1]} : vector<1x512xf32> to vector<1x256xf32>
    %115 = vector.extract_strided_slice %11 {offsets = [0, 94], sizes = [1, 256], strides = [1, 1]} : vector<1x512xf32> to vector<1x256xf32>
    %c8 = arith.constant 8 : index
    %116 = memref.load %arg1[%c8] : memref<98xf32, #tpu.memory_space<smem>>
    %117 = vector.broadcast %116 : f32 to vector<1x256xf32>
    %118 = arith.mulf %117, %114 : vector<1x256xf32>
    %119 = arith.addf %113, %118 : vector<1x256xf32>
    %c57 = arith.constant 57 : index
    %120 = memref.load %arg1[%c57] : memref<98xf32, #tpu.memory_space<smem>>
    %121 = vector.broadcast %120 : f32 to vector<1x256xf32>
    %122 = arith.mulf %121, %115 : vector<1x256xf32>
    %123 = arith.addf %119, %122 : vector<1x256xf32>
    %124 = vector.extract_strided_slice %10 {offsets = [0, 110], sizes = [1, 256], strides = [1, 1]} : vector<1x512xf32> to vector<1x256xf32>
    %125 = vector.extract_strided_slice %11 {offsets = [0, 110], sizes = [1, 256], strides = [1, 1]} : vector<1x512xf32> to vector<1x256xf32>
    %c15 = arith.constant 15 : index
    %126 = memref.load %arg1[%c15] : memref<98xf32, #tpu.memory_space<smem>>
    %127 = vector.broadcast %126 : f32 to vector<1x256xf32>
    %128 = arith.mulf %127, %124 : vector<1x256xf32>
    %129 = arith.addf %123, %128 : vector<1x256xf32>
    %c64 = arith.constant 64 : index
    %130 = memref.load %arg1[%c64] : memref<98xf32, #tpu.memory_space<smem>>
    %131 = vector.broadcast %130 : f32 to vector<1x256xf32>
    %132 = arith.mulf %131, %125 : vector<1x256xf32>
    %133 = arith.addf %129, %132 : vector<1x256xf32>
    %134 = vector.extract_strided_slice %10 {offsets = [0, 126], sizes = [1, 256], strides = [1, 1]} : vector<1x512xf32> to vector<1x256xf32>
    %135 = vector.extract_strided_slice %11 {offsets = [0, 126], sizes = [1, 256], strides = [1, 1]} : vector<1x512xf32> to vector<1x256xf32>
    %c22 = arith.constant 22 : index
    %136 = memref.load %arg1[%c22] : memref<98xf32, #tpu.memory_space<smem>>
    %137 = vector.broadcast %136 : f32 to vector<1x256xf32>
    %138 = arith.mulf %137, %134 : vector<1x256xf32>
    %139 = arith.addf %133, %138 : vector<1x256xf32>
    %c71 = arith.constant 71 : index
    %140 = memref.load %arg1[%c71] : memref<98xf32, #tpu.memory_space<smem>>
    %141 = vector.broadcast %140 : f32 to vector<1x256xf32>
    %142 = arith.mulf %141, %135 : vector<1x256xf32>
    %143 = arith.addf %139, %142 : vector<1x256xf32>
    %144 = vector.extract_strided_slice %10 {offsets = [0, 142], sizes = [1, 256], strides = [1, 1]} : vector<1x512xf32> to vector<1x256xf32>
    %145 = vector.extract_strided_slice %11 {offsets = [0, 142], sizes = [1, 256], strides = [1, 1]} : vector<1x512xf32> to vector<1x256xf32>
    %c29 = arith.constant 29 : index
    %146 = memref.load %arg1[%c29] : memref<98xf32, #tpu.memory_space<smem>>
    %147 = vector.broadcast %146 : f32 to vector<1x256xf32>
    %148 = arith.mulf %147, %144 : vector<1x256xf32>
    %149 = arith.addf %143, %148 : vector<1x256xf32>
    %c78 = arith.constant 78 : index
    %150 = memref.load %arg1[%c78] : memref<98xf32, #tpu.memory_space<smem>>
    %151 = vector.broadcast %150 : f32 to vector<1x256xf32>
    %152 = arith.mulf %151, %145 : vector<1x256xf32>
    %153 = arith.addf %149, %152 : vector<1x256xf32>
    %154 = vector.extract_strided_slice %10 {offsets = [0, 158], sizes = [1, 256], strides = [1, 1]} : vector<1x512xf32> to vector<1x256xf32>
    %155 = vector.extract_strided_slice %11 {offsets = [0, 158], sizes = [1, 256], strides = [1, 1]} : vector<1x512xf32> to vector<1x256xf32>
    %c36 = arith.constant 36 : index
    %156 = memref.load %arg1[%c36] : memref<98xf32, #tpu.memory_space<smem>>
    %157 = vector.broadcast %156 : f32 to vector<1x256xf32>
    %158 = arith.mulf %157, %154 : vector<1x256xf32>
    %159 = arith.addf %153, %158 : vector<1x256xf32>
    %c85 = arith.constant 85 : index
    %160 = memref.load %arg1[%c85] : memref<98xf32, #tpu.memory_space<smem>>
    %161 = vector.broadcast %160 : f32 to vector<1x256xf32>
    %162 = arith.mulf %161, %155 : vector<1x256xf32>
    %163 = arith.addf %159, %162 : vector<1x256xf32>
    %164 = vector.extract_strided_slice %10 {offsets = [0, 174], sizes = [1, 256], strides = [1, 1]} : vector<1x512xf32> to vector<1x256xf32>
    %165 = vector.extract_strided_slice %11 {offsets = [0, 174], sizes = [1, 256], strides = [1, 1]} : vector<1x512xf32> to vector<1x256xf32>
    %c43 = arith.constant 43 : index
    %166 = memref.load %arg1[%c43] : memref<98xf32, #tpu.memory_space<smem>>
    %167 = vector.broadcast %166 : f32 to vector<1x256xf32>
    %168 = arith.mulf %167, %164 : vector<1x256xf32>
    %169 = arith.addf %163, %168 : vector<1x256xf32>
    %c92 = arith.constant 92 : index
    %170 = memref.load %arg1[%c92] : memref<98xf32, #tpu.memory_space<smem>>
    %171 = vector.broadcast %170 : f32 to vector<1x256xf32>
    %172 = arith.mulf %171, %165 : vector<1x256xf32>
    %173 = arith.addf %169, %172 : vector<1x256xf32>
    %cst_15 = arith.constant -2.000000e+00 : f32
    %174 = vector.broadcast %cst_15 : f32 to vector<1x256xf32>
    %175 = arith.addf %19, %174 : vector<1x256xf32>
    %cst_16 = arith.constant 0.000000e+00 : f32
    %176 = vector.broadcast %cst_16 : f32 to vector<1x256xf32>
    %177 = arith.cmpf oge, %175, %176 : vector<1x256xf32>
    %cst_17 = arith.constant 1.600000e+01 : f32
    %178 = vector.broadcast %cst_17 : f32 to vector<1x256xf32>
    %179 = arith.cmpf olt, %175, %178 : vector<1x256xf32>
    %180 = arith.andi %177, %179 : vector<1x256xi1>
    %cst_18 = arith.constant 0.000000e+00 : f32
    %181 = vector.broadcast %cst_18 : f32 to vector<1x256xf32>
    %182 = arith.select %180, %173, %181 : vector<1x256xi1>, vector<1x256xf32>
    %183 = arith.addf %102, %182 : vector<1x256xf32>
    %cst_19 = arith.constant 0.000000e+00 : f32
    %184 = vector.broadcast %cst_19 : f32 to vector<1x256xf32>
    %185 = vector.extract_strided_slice %10 {offsets = [0, 79], sizes = [1, 256], strides = [1, 1]} : vector<1x512xf32> to vector<1x256xf32>
    %186 = vector.extract_strided_slice %11 {offsets = [0, 79], sizes = [1, 256], strides = [1, 1]} : vector<1x512xf32> to vector<1x256xf32>
    %c2 = arith.constant 2 : index
    %187 = memref.load %arg1[%c2] : memref<98xf32, #tpu.memory_space<smem>>
    %188 = vector.broadcast %187 : f32 to vector<1x256xf32>
    %189 = arith.mulf %188, %185 : vector<1x256xf32>
    %190 = arith.addf %184, %189 : vector<1x256xf32>
    %c51 = arith.constant 51 : index
    %191 = memref.load %arg1[%c51] : memref<98xf32, #tpu.memory_space<smem>>
    %192 = vector.broadcast %191 : f32 to vector<1x256xf32>
    %193 = arith.mulf %192, %186 : vector<1x256xf32>
    %194 = arith.addf %190, %193 : vector<1x256xf32>
    %195 = vector.extract_strided_slice %10 {offsets = [0, 95], sizes = [1, 256], strides = [1, 1]} : vector<1x512xf32> to vector<1x256xf32>
    %196 = vector.extract_strided_slice %11 {offsets = [0, 95], sizes = [1, 256], strides = [1, 1]} : vector<1x512xf32> to vector<1x256xf32>
    %c9 = arith.constant 9 : index
    %197 = memref.load %arg1[%c9] : memref<98xf32, #tpu.memory_space<smem>>
    %198 = vector.broadcast %197 : f32 to vector<1x256xf32>
    %199 = arith.mulf %198, %195 : vector<1x256xf32>
    %200 = arith.addf %194, %199 : vector<1x256xf32>
    %c58 = arith.constant 58 : index
    %201 = memref.load %arg1[%c58] : memref<98xf32, #tpu.memory_space<smem>>
    %202 = vector.broadcast %201 : f32 to vector<1x256xf32>
    %203 = arith.mulf %202, %196 : vector<1x256xf32>
    %204 = arith.addf %200, %203 : vector<1x256xf32>
    %205 = vector.extract_strided_slice %10 {offsets = [0, 111], sizes = [1, 256], strides = [1, 1]} : vector<1x512xf32> to vector<1x256xf32>
    %206 = vector.extract_strided_slice %11 {offsets = [0, 111], sizes = [1, 256], strides = [1, 1]} : vector<1x512xf32> to vector<1x256xf32>
    %c16 = arith.constant 16 : index
    %207 = memref.load %arg1[%c16] : memref<98xf32, #tpu.memory_space<smem>>
    %208 = vector.broadcast %207 : f32 to vector<1x256xf32>
    %209 = arith.mulf %208, %205 : vector<1x256xf32>
    %210 = arith.addf %204, %209 : vector<1x256xf32>
    %c65 = arith.constant 65 : index
    %211 = memref.load %arg1[%c65] : memref<98xf32, #tpu.memory_space<smem>>
    %212 = vector.broadcast %211 : f32 to vector<1x256xf32>
    %213 = arith.mulf %212, %206 : vector<1x256xf32>
    %214 = arith.addf %210, %213 : vector<1x256xf32>
    %215 = vector.extract_strided_slice %10 {offsets = [0, 127], sizes = [1, 256], strides = [1, 1]} : vector<1x512xf32> to vector<1x256xf32>
    %216 = vector.extract_strided_slice %11 {offsets = [0, 127], sizes = [1, 256], strides = [1, 1]} : vector<1x512xf32> to vector<1x256xf32>
    %c23 = arith.constant 23 : index
    %217 = memref.load %arg1[%c23] : memref<98xf32, #tpu.memory_space<smem>>
    %218 = vector.broadcast %217 : f32 to vector<1x256xf32>
    %219 = arith.mulf %218, %215 : vector<1x256xf32>
    %220 = arith.addf %214, %219 : vector<1x256xf32>
    %c72 = arith.constant 72 : index
    %221 = memref.load %arg1[%c72] : memref<98xf32, #tpu.memory_space<smem>>
    %222 = vector.broadcast %221 : f32 to vector<1x256xf32>
    %223 = arith.mulf %222, %216 : vector<1x256xf32>
    %224 = arith.addf %220, %223 : vector<1x256xf32>
    %225 = vector.extract_strided_slice %10 {offsets = [0, 143], sizes = [1, 256], strides = [1, 1]} : vector<1x512xf32> to vector<1x256xf32>
    %226 = vector.extract_strided_slice %11 {offsets = [0, 143], sizes = [1, 256], strides = [1, 1]} : vector<1x512xf32> to vector<1x256xf32>
    %c30 = arith.constant 30 : index
    %227 = memref.load %arg1[%c30] : memref<98xf32, #tpu.memory_space<smem>>
    %228 = vector.broadcast %227 : f32 to vector<1x256xf32>
    %229 = arith.mulf %228, %225 : vector<1x256xf32>
    %230 = arith.addf %224, %229 : vector<1x256xf32>
    %c79 = arith.constant 79 : index
    %231 = memref.load %arg1[%c79] : memref<98xf32, #tpu.memory_space<smem>>
    %232 = vector.broadcast %231 : f32 to vector<1x256xf32>
    %233 = arith.mulf %232, %226 : vector<1x256xf32>
    %234 = arith.addf %230, %233 : vector<1x256xf32>
    %235 = vector.extract_strided_slice %10 {offsets = [0, 159], sizes = [1, 256], strides = [1, 1]} : vector<1x512xf32> to vector<1x256xf32>
    %236 = vector.extract_strided_slice %11 {offsets = [0, 159], sizes = [1, 256], strides = [1, 1]} : vector<1x512xf32> to vector<1x256xf32>
    %c37 = arith.constant 37 : index
    %237 = memref.load %arg1[%c37] : memref<98xf32, #tpu.memory_space<smem>>
    %238 = vector.broadcast %237 : f32 to vector<1x256xf32>
    %239 = arith.mulf %238, %235 : vector<1x256xf32>
    %240 = arith.addf %234, %239 : vector<1x256xf32>
    %c86 = arith.constant 86 : index
    %241 = memref.load %arg1[%c86] : memref<98xf32, #tpu.memory_space<smem>>
    %242 = vector.broadcast %241 : f32 to vector<1x256xf32>
    %243 = arith.mulf %242, %236 : vector<1x256xf32>
    %244 = arith.addf %240, %243 : vector<1x256xf32>
    %245 = vector.extract_strided_slice %10 {offsets = [0, 175], sizes = [1, 256], strides = [1, 1]} : vector<1x512xf32> to vector<1x256xf32>
    %246 = vector.extract_strided_slice %11 {offsets = [0, 175], sizes = [1, 256], strides = [1, 1]} : vector<1x512xf32> to vector<1x256xf32>
    %c44 = arith.constant 44 : index
    %247 = memref.load %arg1[%c44] : memref<98xf32, #tpu.memory_space<smem>>
    %248 = vector.broadcast %247 : f32 to vector<1x256xf32>
    %249 = arith.mulf %248, %245 : vector<1x256xf32>
    %250 = arith.addf %244, %249 : vector<1x256xf32>
    %c93 = arith.constant 93 : index
    %251 = memref.load %arg1[%c93] : memref<98xf32, #tpu.memory_space<smem>>
    %252 = vector.broadcast %251 : f32 to vector<1x256xf32>
    %253 = arith.mulf %252, %246 : vector<1x256xf32>
    %254 = arith.addf %250, %253 : vector<1x256xf32>
    %cst_20 = arith.constant -1.000000e+00 : f32
    %255 = vector.broadcast %cst_20 : f32 to vector<1x256xf32>
    %256 = arith.addf %19, %255 : vector<1x256xf32>
    %cst_21 = arith.constant 0.000000e+00 : f32
    %257 = vector.broadcast %cst_21 : f32 to vector<1x256xf32>
    %258 = arith.cmpf oge, %256, %257 : vector<1x256xf32>
    %cst_22 = arith.constant 1.600000e+01 : f32
    %259 = vector.broadcast %cst_22 : f32 to vector<1x256xf32>
    %260 = arith.cmpf olt, %256, %259 : vector<1x256xf32>
    %261 = arith.andi %258, %260 : vector<1x256xi1>
    %cst_23 = arith.constant 0.000000e+00 : f32
    %262 = vector.broadcast %cst_23 : f32 to vector<1x256xf32>
    %263 = arith.select %261, %254, %262 : vector<1x256xi1>, vector<1x256xf32>
    %264 = arith.addf %183, %263 : vector<1x256xf32>
    %cst_24 = arith.constant 0.000000e+00 : f32
    %265 = vector.broadcast %cst_24 : f32 to vector<1x256xf32>
    %266 = vector.extract_strided_slice %10 {offsets = [0, 80], sizes = [1, 256], strides = [1, 1]} : vector<1x512xf32> to vector<1x256xf32>
    %267 = vector.extract_strided_slice %11 {offsets = [0, 80], sizes = [1, 256], strides = [1, 1]} : vector<1x512xf32> to vector<1x256xf32>
    %c3 = arith.constant 3 : index
    %268 = memref.load %arg1[%c3] : memref<98xf32, #tpu.memory_space<smem>>
    %269 = vector.broadcast %268 : f32 to vector<1x256xf32>
    %270 = arith.mulf %269, %266 : vector<1x256xf32>
    %271 = arith.addf %265, %270 : vector<1x256xf32>
    %c52 = arith.constant 52 : index
    %272 = memref.load %arg1[%c52] : memref<98xf32, #tpu.memory_space<smem>>
    %273 = vector.broadcast %272 : f32 to vector<1x256xf32>
    %274 = arith.mulf %273, %267 : vector<1x256xf32>
    %275 = arith.addf %271, %274 : vector<1x256xf32>
    %276 = vector.extract_strided_slice %10 {offsets = [0, 96], sizes = [1, 256], strides = [1, 1]} : vector<1x512xf32> to vector<1x256xf32>
    %277 = vector.extract_strided_slice %11 {offsets = [0, 96], sizes = [1, 256], strides = [1, 1]} : vector<1x512xf32> to vector<1x256xf32>
    %c10 = arith.constant 10 : index
    %278 = memref.load %arg1[%c10] : memref<98xf32, #tpu.memory_space<smem>>
    %279 = vector.broadcast %278 : f32 to vector<1x256xf32>
    %280 = arith.mulf %279, %276 : vector<1x256xf32>
    %281 = arith.addf %275, %280 : vector<1x256xf32>
    %c59 = arith.constant 59 : index
    %282 = memref.load %arg1[%c59] : memref<98xf32, #tpu.memory_space<smem>>
    %283 = vector.broadcast %282 : f32 to vector<1x256xf32>
    %284 = arith.mulf %283, %277 : vector<1x256xf32>
    %285 = arith.addf %281, %284 : vector<1x256xf32>
    %286 = vector.extract_strided_slice %10 {offsets = [0, 112], sizes = [1, 256], strides = [1, 1]} : vector<1x512xf32> to vector<1x256xf32>
    %287 = vector.extract_strided_slice %11 {offsets = [0, 112], sizes = [1, 256], strides = [1, 1]} : vector<1x512xf32> to vector<1x256xf32>
    %c17 = arith.constant 17 : index
    %288 = memref.load %arg1[%c17] : memref<98xf32, #tpu.memory_space<smem>>
    %289 = vector.broadcast %288 : f32 to vector<1x256xf32>
    %290 = arith.mulf %289, %286 : vector<1x256xf32>
    %291 = arith.addf %285, %290 : vector<1x256xf32>
    %c66 = arith.constant 66 : index
    %292 = memref.load %arg1[%c66] : memref<98xf32, #tpu.memory_space<smem>>
    %293 = vector.broadcast %292 : f32 to vector<1x256xf32>
    %294 = arith.mulf %293, %287 : vector<1x256xf32>
    %295 = arith.addf %291, %294 : vector<1x256xf32>
    %296 = vector.extract_strided_slice %10 {offsets = [0, 128], sizes = [1, 256], strides = [1, 1]} : vector<1x512xf32> to vector<1x256xf32>
    %297 = vector.extract_strided_slice %11 {offsets = [0, 128], sizes = [1, 256], strides = [1, 1]} : vector<1x512xf32> to vector<1x256xf32>
    %c24 = arith.constant 24 : index
    %298 = memref.load %arg1[%c24] : memref<98xf32, #tpu.memory_space<smem>>
    %299 = vector.broadcast %298 : f32 to vector<1x256xf32>
    %300 = arith.mulf %299, %296 : vector<1x256xf32>
    %301 = arith.addf %295, %300 : vector<1x256xf32>
    %c73 = arith.constant 73 : index
    %302 = memref.load %arg1[%c73] : memref<98xf32, #tpu.memory_space<smem>>
    %303 = vector.broadcast %302 : f32 to vector<1x256xf32>
    %304 = arith.mulf %303, %297 : vector<1x256xf32>
    %305 = arith.addf %301, %304 : vector<1x256xf32>
    %306 = vector.extract_strided_slice %10 {offsets = [0, 144], sizes = [1, 256], strides = [1, 1]} : vector<1x512xf32> to vector<1x256xf32>
    %307 = vector.extract_strided_slice %11 {offsets = [0, 144], sizes = [1, 256], strides = [1, 1]} : vector<1x512xf32> to vector<1x256xf32>
    %c31 = arith.constant 31 : index
    %308 = memref.load %arg1[%c31] : memref<98xf32, #tpu.memory_space<smem>>
    %309 = vector.broadcast %308 : f32 to vector<1x256xf32>
    %310 = arith.mulf %309, %306 : vector<1x256xf32>
    %311 = arith.addf %305, %310 : vector<1x256xf32>
    %c80 = arith.constant 80 : index
    %312 = memref.load %arg1[%c80] : memref<98xf32, #tpu.memory_space<smem>>
    %313 = vector.broadcast %312 : f32 to vector<1x256xf32>
    %314 = arith.mulf %313, %307 : vector<1x256xf32>
    %315 = arith.addf %311, %314 : vector<1x256xf32>
    %316 = vector.extract_strided_slice %10 {offsets = [0, 160], sizes = [1, 256], strides = [1, 1]} : vector<1x512xf32> to vector<1x256xf32>
    %317 = vector.extract_strided_slice %11 {offsets = [0, 160], sizes = [1, 256], strides = [1, 1]} : vector<1x512xf32> to vector<1x256xf32>
    %c38 = arith.constant 38 : index
    %318 = memref.load %arg1[%c38] : memref<98xf32, #tpu.memory_space<smem>>
    %319 = vector.broadcast %318 : f32 to vector<1x256xf32>
    %320 = arith.mulf %319, %316 : vector<1x256xf32>
    %321 = arith.addf %315, %320 : vector<1x256xf32>
    %c87 = arith.constant 87 : index
    %322 = memref.load %arg1[%c87] : memref<98xf32, #tpu.memory_space<smem>>
    %323 = vector.broadcast %322 : f32 to vector<1x256xf32>
    %324 = arith.mulf %323, %317 : vector<1x256xf32>
    %325 = arith.addf %321, %324 : vector<1x256xf32>
    %326 = vector.extract_strided_slice %10 {offsets = [0, 176], sizes = [1, 256], strides = [1, 1]} : vector<1x512xf32> to vector<1x256xf32>
    %327 = vector.extract_strided_slice %11 {offsets = [0, 176], sizes = [1, 256], strides = [1, 1]} : vector<1x512xf32> to vector<1x256xf32>
    %c45 = arith.constant 45 : index
    %328 = memref.load %arg1[%c45] : memref<98xf32, #tpu.memory_space<smem>>
    %329 = vector.broadcast %328 : f32 to vector<1x256xf32>
    %330 = arith.mulf %329, %326 : vector<1x256xf32>
    %331 = arith.addf %325, %330 : vector<1x256xf32>
    %c94 = arith.constant 94 : index
    %332 = memref.load %arg1[%c94] : memref<98xf32, #tpu.memory_space<smem>>
    %333 = vector.broadcast %332 : f32 to vector<1x256xf32>
    %334 = arith.mulf %333, %327 : vector<1x256xf32>
    %335 = arith.addf %331, %334 : vector<1x256xf32>
    %336 = arith.addf %264, %335 : vector<1x256xf32>
    %cst_25 = arith.constant 0.000000e+00 : f32
    %337 = vector.broadcast %cst_25 : f32 to vector<1x256xf32>
    %338 = vector.extract_strided_slice %10 {offsets = [0, 81], sizes = [1, 256], strides = [1, 1]} : vector<1x512xf32> to vector<1x256xf32>
    %339 = vector.extract_strided_slice %11 {offsets = [0, 81], sizes = [1, 256], strides = [1, 1]} : vector<1x512xf32> to vector<1x256xf32>
    %c4 = arith.constant 4 : index
    %340 = memref.load %arg1[%c4] : memref<98xf32, #tpu.memory_space<smem>>
    %341 = vector.broadcast %340 : f32 to vector<1x256xf32>
    %342 = arith.mulf %341, %338 : vector<1x256xf32>
    %343 = arith.addf %337, %342 : vector<1x256xf32>
    %c53 = arith.constant 53 : index
    %344 = memref.load %arg1[%c53] : memref<98xf32, #tpu.memory_space<smem>>
    %345 = vector.broadcast %344 : f32 to vector<1x256xf32>
    %346 = arith.mulf %345, %339 : vector<1x256xf32>
    %347 = arith.addf %343, %346 : vector<1x256xf32>
    %348 = vector.extract_strided_slice %10 {offsets = [0, 97], sizes = [1, 256], strides = [1, 1]} : vector<1x512xf32> to vector<1x256xf32>
    %349 = vector.extract_strided_slice %11 {offsets = [0, 97], sizes = [1, 256], strides = [1, 1]} : vector<1x512xf32> to vector<1x256xf32>
    %c11 = arith.constant 11 : index
    %350 = memref.load %arg1[%c11] : memref<98xf32, #tpu.memory_space<smem>>
    %351 = vector.broadcast %350 : f32 to vector<1x256xf32>
    %352 = arith.mulf %351, %348 : vector<1x256xf32>
    %353 = arith.addf %347, %352 : vector<1x256xf32>
    %c60 = arith.constant 60 : index
    %354 = memref.load %arg1[%c60] : memref<98xf32, #tpu.memory_space<smem>>
    %355 = vector.broadcast %354 : f32 to vector<1x256xf32>
    %356 = arith.mulf %355, %349 : vector<1x256xf32>
    %357 = arith.addf %353, %356 : vector<1x256xf32>
    %358 = vector.extract_strided_slice %10 {offsets = [0, 113], sizes = [1, 256], strides = [1, 1]} : vector<1x512xf32> to vector<1x256xf32>
    %359 = vector.extract_strided_slice %11 {offsets = [0, 113], sizes = [1, 256], strides = [1, 1]} : vector<1x512xf32> to vector<1x256xf32>
    %c18 = arith.constant 18 : index
    %360 = memref.load %arg1[%c18] : memref<98xf32, #tpu.memory_space<smem>>
    %361 = vector.broadcast %360 : f32 to vector<1x256xf32>
    %362 = arith.mulf %361, %358 : vector<1x256xf32>
    %363 = arith.addf %357, %362 : vector<1x256xf32>
    %c67 = arith.constant 67 : index
    %364 = memref.load %arg1[%c67] : memref<98xf32, #tpu.memory_space<smem>>
    %365 = vector.broadcast %364 : f32 to vector<1x256xf32>
    %366 = arith.mulf %365, %359 : vector<1x256xf32>
    %367 = arith.addf %363, %366 : vector<1x256xf32>
    %368 = vector.extract_strided_slice %10 {offsets = [0, 129], sizes = [1, 256], strides = [1, 1]} : vector<1x512xf32> to vector<1x256xf32>
    %369 = vector.extract_strided_slice %11 {offsets = [0, 129], sizes = [1, 256], strides = [1, 1]} : vector<1x512xf32> to vector<1x256xf32>
    %c25 = arith.constant 25 : index
    %370 = memref.load %arg1[%c25] : memref<98xf32, #tpu.memory_space<smem>>
    %371 = vector.broadcast %370 : f32 to vector<1x256xf32>
    %372 = arith.mulf %371, %368 : vector<1x256xf32>
    %373 = arith.addf %367, %372 : vector<1x256xf32>
    %c74 = arith.constant 74 : index
    %374 = memref.load %arg1[%c74] : memref<98xf32, #tpu.memory_space<smem>>
    %375 = vector.broadcast %374 : f32 to vector<1x256xf32>
    %376 = arith.mulf %375, %369 : vector<1x256xf32>
    %377 = arith.addf %373, %376 : vector<1x256xf32>
    %378 = vector.extract_strided_slice %10 {offsets = [0, 145], sizes = [1, 256], strides = [1, 1]} : vector<1x512xf32> to vector<1x256xf32>
    %379 = vector.extract_strided_slice %11 {offsets = [0, 145], sizes = [1, 256], strides = [1, 1]} : vector<1x512xf32> to vector<1x256xf32>
    %c32 = arith.constant 32 : index
    %380 = memref.load %arg1[%c32] : memref<98xf32, #tpu.memory_space<smem>>
    %381 = vector.broadcast %380 : f32 to vector<1x256xf32>
    %382 = arith.mulf %381, %378 : vector<1x256xf32>
    %383 = arith.addf %377, %382 : vector<1x256xf32>
    %c81 = arith.constant 81 : index
    %384 = memref.load %arg1[%c81] : memref<98xf32, #tpu.memory_space<smem>>
    %385 = vector.broadcast %384 : f32 to vector<1x256xf32>
    %386 = arith.mulf %385, %379 : vector<1x256xf32>
    %387 = arith.addf %383, %386 : vector<1x256xf32>
    %388 = vector.extract_strided_slice %10 {offsets = [0, 161], sizes = [1, 256], strides = [1, 1]} : vector<1x512xf32> to vector<1x256xf32>
    %389 = vector.extract_strided_slice %11 {offsets = [0, 161], sizes = [1, 256], strides = [1, 1]} : vector<1x512xf32> to vector<1x256xf32>
    %c39 = arith.constant 39 : index
    %390 = memref.load %arg1[%c39] : memref<98xf32, #tpu.memory_space<smem>>
    %391 = vector.broadcast %390 : f32 to vector<1x256xf32>
    %392 = arith.mulf %391, %388 : vector<1x256xf32>
    %393 = arith.addf %387, %392 : vector<1x256xf32>
    %c88 = arith.constant 88 : index
    %394 = memref.load %arg1[%c88] : memref<98xf32, #tpu.memory_space<smem>>
    %395 = vector.broadcast %394 : f32 to vector<1x256xf32>
    %396 = arith.mulf %395, %389 : vector<1x256xf32>
    %397 = arith.addf %393, %396 : vector<1x256xf32>
    %398 = vector.extract_strided_slice %10 {offsets = [0, 177], sizes = [1, 256], strides = [1, 1]} : vector<1x512xf32> to vector<1x256xf32>
    %399 = vector.extract_strided_slice %11 {offsets = [0, 177], sizes = [1, 256], strides = [1, 1]} : vector<1x512xf32> to vector<1x256xf32>
    %c46 = arith.constant 46 : index
    %400 = memref.load %arg1[%c46] : memref<98xf32, #tpu.memory_space<smem>>
    %401 = vector.broadcast %400 : f32 to vector<1x256xf32>
    %402 = arith.mulf %401, %398 : vector<1x256xf32>
    %403 = arith.addf %397, %402 : vector<1x256xf32>
    %c95 = arith.constant 95 : index
    %404 = memref.load %arg1[%c95] : memref<98xf32, #tpu.memory_space<smem>>
    %405 = vector.broadcast %404 : f32 to vector<1x256xf32>
    %406 = arith.mulf %405, %399 : vector<1x256xf32>
    %407 = arith.addf %403, %406 : vector<1x256xf32>
    %cst_26 = arith.constant 1.000000e+00 : f32
    %408 = vector.broadcast %cst_26 : f32 to vector<1x256xf32>
    %409 = arith.addf %19, %408 : vector<1x256xf32>
    %cst_27 = arith.constant 0.000000e+00 : f32
    %410 = vector.broadcast %cst_27 : f32 to vector<1x256xf32>
    %411 = arith.cmpf oge, %409, %410 : vector<1x256xf32>
    %cst_28 = arith.constant 1.600000e+01 : f32
    %412 = vector.broadcast %cst_28 : f32 to vector<1x256xf32>
    %413 = arith.cmpf olt, %409, %412 : vector<1x256xf32>
    %414 = arith.andi %411, %413 : vector<1x256xi1>
    %cst_29 = arith.constant 0.000000e+00 : f32
    %415 = vector.broadcast %cst_29 : f32 to vector<1x256xf32>
    %416 = arith.select %414, %407, %415 : vector<1x256xi1>, vector<1x256xf32>
    %417 = arith.addf %336, %416 : vector<1x256xf32>
    %cst_30 = arith.constant 0.000000e+00 : f32
    %418 = vector.broadcast %cst_30 : f32 to vector<1x256xf32>
    %419 = vector.extract_strided_slice %10 {offsets = [0, 82], sizes = [1, 256], strides = [1, 1]} : vector<1x512xf32> to vector<1x256xf32>
    %420 = vector.extract_strided_slice %11 {offsets = [0, 82], sizes = [1, 256], strides = [1, 1]} : vector<1x512xf32> to vector<1x256xf32>
    %c5 = arith.constant 5 : index
    %421 = memref.load %arg1[%c5] : memref<98xf32, #tpu.memory_space<smem>>
    %422 = vector.broadcast %421 : f32 to vector<1x256xf32>
    %423 = arith.mulf %422, %419 : vector<1x256xf32>
    %424 = arith.addf %418, %423 : vector<1x256xf32>
    %c54 = arith.constant 54 : index
    %425 = memref.load %arg1[%c54] : memref<98xf32, #tpu.memory_space<smem>>
    %426 = vector.broadcast %425 : f32 to vector<1x256xf32>
    %427 = arith.mulf %426, %420 : vector<1x256xf32>
    %428 = arith.addf %424, %427 : vector<1x256xf32>
    %429 = vector.extract_strided_slice %10 {offsets = [0, 98], sizes = [1, 256], strides = [1, 1]} : vector<1x512xf32> to vector<1x256xf32>
    %430 = vector.extract_strided_slice %11 {offsets = [0, 98], sizes = [1, 256], strides = [1, 1]} : vector<1x512xf32> to vector<1x256xf32>
    %c12 = arith.constant 12 : index
    %431 = memref.load %arg1[%c12] : memref<98xf32, #tpu.memory_space<smem>>
    %432 = vector.broadcast %431 : f32 to vector<1x256xf32>
    %433 = arith.mulf %432, %429 : vector<1x256xf32>
    %434 = arith.addf %428, %433 : vector<1x256xf32>
    %c61 = arith.constant 61 : index
    %435 = memref.load %arg1[%c61] : memref<98xf32, #tpu.memory_space<smem>>
    %436 = vector.broadcast %435 : f32 to vector<1x256xf32>
    %437 = arith.mulf %436, %430 : vector<1x256xf32>
    %438 = arith.addf %434, %437 : vector<1x256xf32>
    %439 = vector.extract_strided_slice %10 {offsets = [0, 114], sizes = [1, 256], strides = [1, 1]} : vector<1x512xf32> to vector<1x256xf32>
    %440 = vector.extract_strided_slice %11 {offsets = [0, 114], sizes = [1, 256], strides = [1, 1]} : vector<1x512xf32> to vector<1x256xf32>
    %c19 = arith.constant 19 : index
    %441 = memref.load %arg1[%c19] : memref<98xf32, #tpu.memory_space<smem>>
    %442 = vector.broadcast %441 : f32 to vector<1x256xf32>
    %443 = arith.mulf %442, %439 : vector<1x256xf32>
    %444 = arith.addf %438, %443 : vector<1x256xf32>
    %c68 = arith.constant 68 : index
    %445 = memref.load %arg1[%c68] : memref<98xf32, #tpu.memory_space<smem>>
    %446 = vector.broadcast %445 : f32 to vector<1x256xf32>
    %447 = arith.mulf %446, %440 : vector<1x256xf32>
    %448 = arith.addf %444, %447 : vector<1x256xf32>
    %449 = vector.extract_strided_slice %10 {offsets = [0, 130], sizes = [1, 256], strides = [1, 1]} : vector<1x512xf32> to vector<1x256xf32>
    %450 = vector.extract_strided_slice %11 {offsets = [0, 130], sizes = [1, 256], strides = [1, 1]} : vector<1x512xf32> to vector<1x256xf32>
    %c26 = arith.constant 26 : index
    %451 = memref.load %arg1[%c26] : memref<98xf32, #tpu.memory_space<smem>>
    %452 = vector.broadcast %451 : f32 to vector<1x256xf32>
    %453 = arith.mulf %452, %449 : vector<1x256xf32>
    %454 = arith.addf %448, %453 : vector<1x256xf32>
    %c75 = arith.constant 75 : index
    %455 = memref.load %arg1[%c75] : memref<98xf32, #tpu.memory_space<smem>>
    %456 = vector.broadcast %455 : f32 to vector<1x256xf32>
    %457 = arith.mulf %456, %450 : vector<1x256xf32>
    %458 = arith.addf %454, %457 : vector<1x256xf32>
    %459 = vector.extract_strided_slice %10 {offsets = [0, 146], sizes = [1, 256], strides = [1, 1]} : vector<1x512xf32> to vector<1x256xf32>
    %460 = vector.extract_strided_slice %11 {offsets = [0, 146], sizes = [1, 256], strides = [1, 1]} : vector<1x512xf32> to vector<1x256xf32>
    %c33 = arith.constant 33 : index
    %461 = memref.load %arg1[%c33] : memref<98xf32, #tpu.memory_space<smem>>
    %462 = vector.broadcast %461 : f32 to vector<1x256xf32>
    %463 = arith.mulf %462, %459 : vector<1x256xf32>
    %464 = arith.addf %458, %463 : vector<1x256xf32>
    %c82 = arith.constant 82 : index
    %465 = memref.load %arg1[%c82] : memref<98xf32, #tpu.memory_space<smem>>
    %466 = vector.broadcast %465 : f32 to vector<1x256xf32>
    %467 = arith.mulf %466, %460 : vector<1x256xf32>
    %468 = arith.addf %464, %467 : vector<1x256xf32>
    %469 = vector.extract_strided_slice %10 {offsets = [0, 162], sizes = [1, 256], strides = [1, 1]} : vector<1x512xf32> to vector<1x256xf32>
    %470 = vector.extract_strided_slice %11 {offsets = [0, 162], sizes = [1, 256], strides = [1, 1]} : vector<1x512xf32> to vector<1x256xf32>
    %c40 = arith.constant 40 : index
    %471 = memref.load %arg1[%c40] : memref<98xf32, #tpu.memory_space<smem>>
    %472 = vector.broadcast %471 : f32 to vector<1x256xf32>
    %473 = arith.mulf %472, %469 : vector<1x256xf32>
    %474 = arith.addf %468, %473 : vector<1x256xf32>
    %c89 = arith.constant 89 : index
    %475 = memref.load %arg1[%c89] : memref<98xf32, #tpu.memory_space<smem>>
    %476 = vector.broadcast %475 : f32 to vector<1x256xf32>
    %477 = arith.mulf %476, %470 : vector<1x256xf32>
    %478 = arith.addf %474, %477 : vector<1x256xf32>
    %479 = vector.extract_strided_slice %10 {offsets = [0, 178], sizes = [1, 256], strides = [1, 1]} : vector<1x512xf32> to vector<1x256xf32>
    %480 = vector.extract_strided_slice %11 {offsets = [0, 178], sizes = [1, 256], strides = [1, 1]} : vector<1x512xf32> to vector<1x256xf32>
    %c47 = arith.constant 47 : index
    %481 = memref.load %arg1[%c47] : memref<98xf32, #tpu.memory_space<smem>>
    %482 = vector.broadcast %481 : f32 to vector<1x256xf32>
    %483 = arith.mulf %482, %479 : vector<1x256xf32>
    %484 = arith.addf %478, %483 : vector<1x256xf32>
    %c96 = arith.constant 96 : index
    %485 = memref.load %arg1[%c96] : memref<98xf32, #tpu.memory_space<smem>>
    %486 = vector.broadcast %485 : f32 to vector<1x256xf32>
    %487 = arith.mulf %486, %480 : vector<1x256xf32>
    %488 = arith.addf %484, %487 : vector<1x256xf32>
    %cst_31 = arith.constant 2.000000e+00 : f32
    %489 = vector.broadcast %cst_31 : f32 to vector<1x256xf32>
    %490 = arith.addf %19, %489 : vector<1x256xf32>
    %cst_32 = arith.constant 0.000000e+00 : f32
    %491 = vector.broadcast %cst_32 : f32 to vector<1x256xf32>
    %492 = arith.cmpf oge, %490, %491 : vector<1x256xf32>
    %cst_33 = arith.constant 1.600000e+01 : f32
    %493 = vector.broadcast %cst_33 : f32 to vector<1x256xf32>
    %494 = arith.cmpf olt, %490, %493 : vector<1x256xf32>
    %495 = arith.andi %492, %494 : vector<1x256xi1>
    %cst_34 = arith.constant 0.000000e+00 : f32
    %496 = vector.broadcast %cst_34 : f32 to vector<1x256xf32>
    %497 = arith.select %495, %488, %496 : vector<1x256xi1>, vector<1x256xf32>
    %498 = arith.addf %417, %497 : vector<1x256xf32>
    %cst_35 = arith.constant 0.000000e+00 : f32
    %499 = vector.broadcast %cst_35 : f32 to vector<1x256xf32>
    %500 = vector.extract_strided_slice %10 {offsets = [0, 83], sizes = [1, 256], strides = [1, 1]} : vector<1x512xf32> to vector<1x256xf32>
    %501 = vector.extract_strided_slice %11 {offsets = [0, 83], sizes = [1, 256], strides = [1, 1]} : vector<1x512xf32> to vector<1x256xf32>
    %c6 = arith.constant 6 : index
    %502 = memref.load %arg1[%c6] : memref<98xf32, #tpu.memory_space<smem>>
    %503 = vector.broadcast %502 : f32 to vector<1x256xf32>
    %504 = arith.mulf %503, %500 : vector<1x256xf32>
    %505 = arith.addf %499, %504 : vector<1x256xf32>
    %c55 = arith.constant 55 : index
    %506 = memref.load %arg1[%c55] : memref<98xf32, #tpu.memory_space<smem>>
    %507 = vector.broadcast %506 : f32 to vector<1x256xf32>
    %508 = arith.mulf %507, %501 : vector<1x256xf32>
    %509 = arith.addf %505, %508 : vector<1x256xf32>
    %510 = vector.extract_strided_slice %10 {offsets = [0, 99], sizes = [1, 256], strides = [1, 1]} : vector<1x512xf32> to vector<1x256xf32>
    %511 = vector.extract_strided_slice %11 {offsets = [0, 99], sizes = [1, 256], strides = [1, 1]} : vector<1x512xf32> to vector<1x256xf32>
    %c13 = arith.constant 13 : index
    %512 = memref.load %arg1[%c13] : memref<98xf32, #tpu.memory_space<smem>>
    %513 = vector.broadcast %512 : f32 to vector<1x256xf32>
    %514 = arith.mulf %513, %510 : vector<1x256xf32>
    %515 = arith.addf %509, %514 : vector<1x256xf32>
    %c62 = arith.constant 62 : index
    %516 = memref.load %arg1[%c62] : memref<98xf32, #tpu.memory_space<smem>>
    %517 = vector.broadcast %516 : f32 to vector<1x256xf32>
    %518 = arith.mulf %517, %511 : vector<1x256xf32>
    %519 = arith.addf %515, %518 : vector<1x256xf32>
    %520 = vector.extract_strided_slice %10 {offsets = [0, 115], sizes = [1, 256], strides = [1, 1]} : vector<1x512xf32> to vector<1x256xf32>
    %521 = vector.extract_strided_slice %11 {offsets = [0, 115], sizes = [1, 256], strides = [1, 1]} : vector<1x512xf32> to vector<1x256xf32>
    %c20 = arith.constant 20 : index
    %522 = memref.load %arg1[%c20] : memref<98xf32, #tpu.memory_space<smem>>
    %523 = vector.broadcast %522 : f32 to vector<1x256xf32>
    %524 = arith.mulf %523, %520 : vector<1x256xf32>
    %525 = arith.addf %519, %524 : vector<1x256xf32>
    %c69 = arith.constant 69 : index
    %526 = memref.load %arg1[%c69] : memref<98xf32, #tpu.memory_space<smem>>
    %527 = vector.broadcast %526 : f32 to vector<1x256xf32>
    %528 = arith.mulf %527, %521 : vector<1x256xf32>
    %529 = arith.addf %525, %528 : vector<1x256xf32>
    %530 = vector.extract_strided_slice %10 {offsets = [0, 131], sizes = [1, 256], strides = [1, 1]} : vector<1x512xf32> to vector<1x256xf32>
    %531 = vector.extract_strided_slice %11 {offsets = [0, 131], sizes = [1, 256], strides = [1, 1]} : vector<1x512xf32> to vector<1x256xf32>
    %c27 = arith.constant 27 : index
    %532 = memref.load %arg1[%c27] : memref<98xf32, #tpu.memory_space<smem>>
    %533 = vector.broadcast %532 : f32 to vector<1x256xf32>
    %534 = arith.mulf %533, %530 : vector<1x256xf32>
    %535 = arith.addf %529, %534 : vector<1x256xf32>
    %c76 = arith.constant 76 : index
    %536 = memref.load %arg1[%c76] : memref<98xf32, #tpu.memory_space<smem>>
    %537 = vector.broadcast %536 : f32 to vector<1x256xf32>
    %538 = arith.mulf %537, %531 : vector<1x256xf32>
    %539 = arith.addf %535, %538 : vector<1x256xf32>
    %540 = vector.extract_strided_slice %10 {offsets = [0, 147], sizes = [1, 256], strides = [1, 1]} : vector<1x512xf32> to vector<1x256xf32>
    %541 = vector.extract_strided_slice %11 {offsets = [0, 147], sizes = [1, 256], strides = [1, 1]} : vector<1x512xf32> to vector<1x256xf32>
    %c34 = arith.constant 34 : index
    %542 = memref.load %arg1[%c34] : memref<98xf32, #tpu.memory_space<smem>>
    %543 = vector.broadcast %542 : f32 to vector<1x256xf32>
    %544 = arith.mulf %543, %540 : vector<1x256xf32>
    %545 = arith.addf %539, %544 : vector<1x256xf32>
    %c83 = arith.constant 83 : index
    %546 = memref.load %arg1[%c83] : memref<98xf32, #tpu.memory_space<smem>>
    %547 = vector.broadcast %546 : f32 to vector<1x256xf32>
    %548 = arith.mulf %547, %541 : vector<1x256xf32>
    %549 = arith.addf %545, %548 : vector<1x256xf32>
    %550 = vector.extract_strided_slice %10 {offsets = [0, 163], sizes = [1, 256], strides = [1, 1]} : vector<1x512xf32> to vector<1x256xf32>
    %551 = vector.extract_strided_slice %11 {offsets = [0, 163], sizes = [1, 256], strides = [1, 1]} : vector<1x512xf32> to vector<1x256xf32>
    %c41 = arith.constant 41 : index
    %552 = memref.load %arg1[%c41] : memref<98xf32, #tpu.memory_space<smem>>
    %553 = vector.broadcast %552 : f32 to vector<1x256xf32>
    %554 = arith.mulf %553, %550 : vector<1x256xf32>
    %555 = arith.addf %549, %554 : vector<1x256xf32>
    %c90 = arith.constant 90 : index
    %556 = memref.load %arg1[%c90] : memref<98xf32, #tpu.memory_space<smem>>
    %557 = vector.broadcast %556 : f32 to vector<1x256xf32>
    %558 = arith.mulf %557, %551 : vector<1x256xf32>
    %559 = arith.addf %555, %558 : vector<1x256xf32>
    %560 = vector.extract_strided_slice %10 {offsets = [0, 179], sizes = [1, 256], strides = [1, 1]} : vector<1x512xf32> to vector<1x256xf32>
    %561 = vector.extract_strided_slice %11 {offsets = [0, 179], sizes = [1, 256], strides = [1, 1]} : vector<1x512xf32> to vector<1x256xf32>
    %c48 = arith.constant 48 : index
    %562 = memref.load %arg1[%c48] : memref<98xf32, #tpu.memory_space<smem>>
    %563 = vector.broadcast %562 : f32 to vector<1x256xf32>
    %564 = arith.mulf %563, %560 : vector<1x256xf32>
    %565 = arith.addf %559, %564 : vector<1x256xf32>
    %c97 = arith.constant 97 : index
    %566 = memref.load %arg1[%c97] : memref<98xf32, #tpu.memory_space<smem>>
    %567 = vector.broadcast %566 : f32 to vector<1x256xf32>
    %568 = arith.mulf %567, %561 : vector<1x256xf32>
    %569 = arith.addf %565, %568 : vector<1x256xf32>
    %cst_36 = arith.constant 3.000000e+00 : f32
    %570 = vector.broadcast %cst_36 : f32 to vector<1x256xf32>
    %571 = arith.addf %19, %570 : vector<1x256xf32>
    %cst_37 = arith.constant 0.000000e+00 : f32
    %572 = vector.broadcast %cst_37 : f32 to vector<1x256xf32>
    %573 = arith.cmpf oge, %571, %572 : vector<1x256xf32>
    %cst_38 = arith.constant 1.600000e+01 : f32
    %574 = vector.broadcast %cst_38 : f32 to vector<1x256xf32>
    %575 = arith.cmpf olt, %571, %574 : vector<1x256xf32>
    %576 = arith.andi %573, %575 : vector<1x256xi1>
    %cst_39 = arith.constant 0.000000e+00 : f32
    %577 = vector.broadcast %cst_39 : f32 to vector<1x256xf32>
    %578 = arith.select %576, %569, %577 : vector<1x256xi1>, vector<1x256xf32>
    %579 = arith.addf %498, %578 : vector<1x256xf32>
    %580 = arith.negf %579 : vector<1x256xf32>
    %581 = math.exp %580 : vector<1x256xf32>
    %cst_40 = arith.constant 1.000000e+00 : f32
    %582 = vector.broadcast %cst_40 : f32 to vector<1x256xf32>
    %583 = arith.addf %582, %581 : vector<1x256xf32>
    %584 = arith.divf %582, %583 : vector<1x256xf32>
    %c0_i32_41 = arith.constant 0 : i32
    %c4_i32_42 = arith.constant 4 : i32
    %585 = arith.muli %c0_i32_41, %c4_i32_42 : i32
    %c0_43 = arith.constant 0 : index
    %586 = arith.index_cast %585 : i32 to index
    %c0_44 = arith.constant 0 : index
    %587 = vector.load %arg3[%c0_43, %586, %c0_44] : memref<1x4x256xf32, #tpu.memory_space<vmem>>, vector<1x4x256xf32>
    %588 = vector.shape_cast %584 : vector<1x256xf32> to vector<1x1x256xf32>
    %589 = vector.broadcast %588 : vector<1x1x256xf32> to vector<1x4x256xf32>
    %590 = arith.mulf %587, %589 : vector<1x4x256xf32>
    %c0_45 = arith.constant 0 : index
    %591 = arith.index_cast %585 : i32 to index
    %c0_46 = arith.constant 0 : index
    %592 = vector.load %arg4[%c0_45, %591, %c0_46] : memref<1x4x256xf32, #tpu.memory_space<vmem>>, vector<1x4x256xf32>
    tpu.vector_store %arg4[%c0_45, %591, %c0_46], %590 {strides = array<i32>} : memref<1x4x256xf32, #tpu.memory_space<vmem>>, vector<1x4x256xf32>,
    %c1_i32_47 = arith.constant 1 : i32
    return
  }
  func.func @transform_0(%arg0: i32, %arg1: memref<98xf32, #tpu.memory_space<smem>>, %arg2: memref<1xf32, #tpu.memory_space<smem>>) -> (i32, i32, i32) {
    %c0_i32 = arith.constant 0 : i32
    %c0_i32_0 = arith.constant 0 : i32
    %c0_i32_1 = arith.constant 0 : i32
    return %arg0, %c0_i32, %c0_i32_0 : i32, i32, i32
  }
  func.func @transform_1(%arg0: i32, %arg1: memref<98xf32, #tpu.memory_space<smem>>, %arg2: memref<1xf32, #tpu.memory_space<smem>>) -> (i32, i32, i32) {
    %c0_i32 = arith.constant 0 : i32
    %c0_i32_0 = arith.constant 0 : i32
    %c0_i32_1 = arith.constant 0 : i32
    return %arg0, %c0_i32, %c0_i32_0 : i32, i32, i32
  }
}

</mosaic_0001>

<llo_original>
// kernel: tpu_custom_call.1
$region0: #{tpu_custom_call.1}
  #allocation0 [shape = 'u32[]', space=smem, size = 0x4, offset = 0x4, fixed_abs, tag = 'smem constant byte address 0x4 - core index']
  #allocation1 [shape = 'u32[72,128]{1,0:T(1,128)}', space=vmem, size = 0x9000, scoped, tag = 'internal scratch']
  #allocation2 [shape = 's32[1]{0}', space=sflag, size = 0x4, scoped, tag = 'scoped memory for tpu_custom_call.1']
  #allocation3 [shape = 'u8[512]{0}', space=smem, size = 0x200, scoped, tag = 'prefetched SMEM operand 0']
  #allocation4 [shape = 'f32[1]{0:T(128)S(6)}', space=smem, size = 0x200, scoped, tag = 'prefetched SMEM operand 1']
  %s0 = inlined_call_operand.vmem [shape: f32[98], index: 0, kind: input, shape index: {}]
  %s1 = inlined_call_operand.<no memory space> [shape: f32[1], index: 1, kind: input, shape index: {}]
  %s2 = inlined_call_operand.hbm [shape: f32[2,4,256], index: 2, kind: input, shape index: {}]
  %s3 = inlined_call_operand.hbm [shape: f32[2,4,256], index: 3, kind: output, shape index: {}]
  %s4 = sld [smem:[#allocation0]]
  $region41: #{tpu_custom_call.1} parent=0
    _
  %s6 = ssub.s32 1, %s4
  %s7 = scalar_select 0, %s6, %s4
  %s9 = sshll.u32 %s0, 4
  %s10 = int_to_ptr.vmem [resolvable:$true] %s9
  %12 = dma.vmem_to_smem %s10, 16, [#allocation3], [#allocation2]
  %13 = sst [smem:[#allocation4]] %s1
  %15 = dma.done [#allocation2], 16
  %16 = sfence
  $region1: #{tpu_custom_call.1} parent=0
    #allocation5 [shape = 'u8[8192]{0}', space=vmem, size = 0x2000, scoped, tag = 'input window, operand 2']
    #allocation6 [shape = 's32[2]{0}', space=sflag, size = 0x8, scoped, tag = 'scoped memory for tpu_custom_call.1']
    #allocation7 [shape = 's32[2]{0}', space=sflag, size = 0x8, scoped, tag = 'scoped memory for tpu_custom_call.1']
    #allocation8 [shape = 'u8[8192]{0}', space=vmem, size = 0x2000, scoped, tag = 'output window, operand 0']
    %17 = vsyncpa [#allocation6], 0
    %s18 = scalar_lea.sflag [#allocation6], 1
    %19 = vsyncpa %s18, 0
    %20 = vsyncpa [#allocation7], 0
    %s21 = scalar_lea.sflag [#allocation7], 1
    %22 = vsyncpa %s21, 0
    loop: start=0, step=1, limit=4
    $region2: #{tpu_custom_call.1} parent=1 // loop_pre_header
      _
    $region3: #{tpu_custom_call.1} parent=1 // loop_header
      %s24 = sphi 0, %s28
      %p25 = scmp.ge.s32.totalorder %s24, 4
      %s34 = sphi 0, %s36
      %s37 = sphi 0, %s34
      %s38 = sphi 0, %s37
      %s54 = sphi 0, %s38
      %s60 = sphi 0, %s62
      %s63 = sphi 0, %s60
      %s64 = sphi 0, %s63
      %s80 = sphi 0, %s64
    $region4: #{tpu_custom_call.1} parent=1 // loop_header_branch
      %27 = sbr.rel (%p25) target = $region8
    $region5: #{tpu_custom_call.1} parent=1 // loop_body
      %s29 = ssub.s32 %s24, 1
      %s30 = ssub.s32 %s24, 2
      %s31 = sadd.s32 %s24, 1
      %s32 = ssub.s32 %s24, %s31
      %p33 = scmp.eq.s32.totalorder %s32, 0
      %s35 = sadd.s32 %s34, 1
      %s36 = scalar_select %p33, %s34, %s35
      %p39 = pneg %p33
      %p40 = scmp.eq.s32.totalorder %s24, 1
      %p41 = por %p39, %p40
      %p42 = scmp.ne.s32.totalorder %s34, %s37
      %p43 = scmp.eq.s32.totalorder %s24, 0
      %p44 = por %p42, %p43
      %p45 = scmp.ne.s32.totalorder %s34, %s37
      %p46 = scmp.eq.s32.totalorder %s29, 1
      %p47 = por %p45, %p46
      %p48 = scmp.ne.s32.totalorder %s37, %s38
      %p49 = scmp.eq.s32.totalorder %s29, 0
      %p50 = por %p48, %p49
      %p51 = scmp.ne.s32.totalorder %s37, %s38
      %p52 = scmp.eq.s32.totalorder %s30, 1
      %p53 = por %p51, %p52
      %p55 = scmp.ne.s32.totalorder %s38, %s54
      %p56 = scmp.eq.s32.totalorder %s30, 0
      %p57 = por %p55, %p56
      %s58 = ssub.s32 %s24, %s31
      %p59 = scmp.eq.s32.totalorder %s58, 0
      %s61 = sadd.s32 %s60, 1
      %s62 = scalar_select %p59, %s60, %s61
      %p65 = pneg %p59
      %p66 = scmp.eq.s32.totalorder %s24, 1
      %p67 = por %p65, %p66
      %p68 = scmp.ne.s32.totalorder %s60, %s63
      %p69 = scmp.eq.s32.totalorder %s24, 0
      %p70 = por %p68, %p69
      %p71 = scmp.ne.s32.totalorder %s60, %s63
      %p72 = scmp.eq.s32.totalorder %s29, 1
      %p73 = por %p71, %p72
      %p74 = scmp.ne.s32.totalorder %s63, %s64
      %p75 = scmp.eq.s32.totalorder %s29, 0
      %p76 = por %p74, %p75
      %p77 = scmp.ne.s32.totalorder %s63, %s64
      %p78 = scmp.eq.s32.totalorder %s30, 1
      %p79 = por %p77, %p78
      %p81 = scmp.ne.s32.totalorder %s64, %s80
      %p82 = scmp.eq.s32.totalorder %s30, 0
      %p83 = por %p81, %p82
      %p84 = scmp.le.s32.totalorder 1, %s24
      %p85 = scmp.lt.s32.totalorder %s24, 3
      %p86 = pnand %p84, %p85
      %p87 = pneg %p86
      // Predicated region
      $region9: #{tpu_custom_call.1} parent=5 // pred_check
        _
      $region10: #{tpu_custom_call.1} parent=5 // pred_check_branch
        %89 = sbr.rel (%p86) target = $region12
      $region11: #{tpu_custom_call.1} parent=5 // pred_region
        %s90 = ssub.s32 %s24, 1
      $region12: #{tpu_custom_call.1} parent=5 // pred_fallthru
        _
      %p91 = scmp.lt.s32.totalorder %s24, 2
      // Predicated region
      $region13: #{tpu_custom_call.1} parent=5 // pred_check
        %p92 = pneg %p91
      $region14: #{tpu_custom_call.1} parent=5 // pred_check_branch
        %94 = sbr.rel (%p92) target = $region16
      $region15: #{tpu_custom_call.1} parent=5 // pred_region
        // Predicated region
        $region17: #{tpu_custom_call.1} parent=15 // pred_check
          %p95 = pneg %p44
        $region18: #{tpu_custom_call.1} parent=15 // pred_check_branch
          %97 = sbr.rel (%p95) target = $region20
        $region19: #{tpu_custom_call.1} parent=15 // pred_region
          %s98 = sand.u32 %s34, 1
          %s99 = scalar_lea.sflag [#allocation6], %s98
          %s100 = sand.u32 %s34, 1
          %s101 = smul.addr %s100, 8
          %s102 = scalar_lea.vmem [#allocation5], %s101
          %104 = vsyncadd %s99, 0
          %s105 = smul.addr %s24, 2
          %s106 = smul.addr %s105, 4
          %s107 = scalar_lea.hbm %s2, %s106
          %s109 = sshll.u32 %s107, 4
          %s110 = int_to_ptr.hbm [resolvable:$true] %s109
          %s111 = sshll.u32 %s102, 4
          %s112 = int_to_ptr.vmem [resolvable:$true] %s111
          %114 = dma.hbm_to_vmem [thread:$0]  %s110, 128, %s112, %s99
        $region20: #{tpu_custom_call.1} parent=15 // pred_fallthru
          _
      $region16: #{tpu_custom_call.1} parent=5 // pred_fallthru
        _
      %p115 = scmp.le.s32.totalorder 1, %s24
      %p116 = scmp.lt.s32.totalorder %s24, 3
      %p117 = pnand %p115, %p116
      %p118 = pneg %p117
      // Predicated region
      $region21: #{tpu_custom_call.1} parent=5 // pred_check
        _
      $region22: #{tpu_custom_call.1} parent=5 // pred_check_branch
        %120 = sbr.rel (%p117) target = $region24
      $region23: #{tpu_custom_call.1} parent=5 // pred_region
        %s121 = ssub.s32 %s24, 1
        %s122 = sand.u32 %s37, 1
        %s123 = scalar_lea.sflag [#allocation6], %s122
        %s124 = sand.u32 %s37, 1
        %s125 = smul.addr %s124, 8
        %s126 = scalar_lea.vmem [#allocation5], %s125
        // Predicated region
        $region25: #{tpu_custom_call.1} parent=23 // pred_check
          %p127 = pneg %p50
        $region26: #{tpu_custom_call.1} parent=23 // pred_check_branch
          %129 = sbr.rel (%p127) target = $region28
        $region27: #{tpu_custom_call.1} parent=23 // pred_region
          %131 = dma.done %s123, 128
        $region28: #{tpu_custom_call.1} parent=23 // pred_fallthru
          _
        %s132 = sand.u32 %s37, 1
        %s133 = scalar_lea.sflag [#allocation6], %s132
        %s134 = sand.u32 %s37, 1
        %s135 = smul.addr %s134, 8
        %s136 = scalar_lea.vmem [#allocation5], %s135
        %p137 = pneg %p50
        %p138 = pneg %p47
        %p139 = pneg %p76
        %p140 = pneg %p73
        %s141 = sand.u32 %s63, 1
        %s142 = scalar_lea.sflag [#allocation7], %s141
        %s143 = sand.u32 %s63, 1
        %s144 = smul.addr %s143, 8
        %s145 = scalar_lea.vmem [#allocation8], %s144
        %v146 = vld [vmem:[%s126] sm:$0xff]
        %148 = vst [vmem:[#allocation1] ss:$2 sm:$0xff] %v146
        %v149 = vld.sshfl [vmem:[#allocation1] sm:$0xff pattern:$0x75316420]
        %v150 = vld.sshfl [vmem:[#allocation1 + $0x8] sm:$0xff pattern:$0x75316420]
        %vm153 = vcmask 1043456
        %v154 = vsel %vm153, %v149, -inf
        %v155 = vrot.slane %v154, 4
        %v156 = vmax.f32 %v154, %v155
        %v157 = vrot.slane %v156, 2
        %v158 = vmax.f32 %v156, %v157
        %v159 = vrot.slane %v158, 1
        %v160 = vmax.f32 %v158, %v159
        %v161 = vsel %vm153, %v150, -inf
        %v162 = vrot.slane %v161, 4
        %v163 = vmax.f32 %v161, %v162
        %v164 = vrot.slane %v163, 2
        %v165 = vmax.f32 %v163, %v164
        %v166 = vrot.slane %v165, 1
        %v167 = vmax.f32 %v165, %v166
        %168 = vst [vmem:[#allocation1] ss:$2 sm:$0xff] %v146
        %v169 = vld.sshfl [vmem:[#allocation1] sm:$0xff pattern:$0x75316420]
        %v170 = vld.sshfl [vmem:[#allocation1 + $0x8] sm:$0xff pattern:$0x75316420]
        %v173 = vsel %vm153, %v169, 0.0
        %v174 = vrot.slane %v173, 4
        %v175 = vadd.f32 %v173, %v174
        %v176 = vrot.slane %v175, 2
        %v177 = vadd.f32 %v175, %v176
        %v178 = vrot.slane %v177, 1
        %v179 = vadd.f32 %v177, %v178
        %v180 = vsel %vm153, %v170, 0.0
        %v181 = vrot.slane %v180, 4
        %v182 = vadd.f32 %v180, %v181
        %v183 = vrot.slane %v182, 2
        %v184 = vadd.f32 %v182, %v183
        %v185 = vrot.slane %v184, 1
        %v186 = vadd.f32 %v184, %v185
        %v187 = vadd.f32 %v179, 0.0
        %v188 = vadd.f32 %v186, 0.0
        %v189 = vlaneseq
        %v190 = vand.u32 %v189, 127
        %v191 = vadd.s32 %v190, 128
        %v192 = vcvt.s32.f32 %v190
        %v193 = vcvt.s32.f32 %v191
        %v194 = vrcp.pop 16.0
        %v195 = vmul.f32 16.0, %v194
        %v196 = vsub.f32 1.0, %v195
        %v197 = vmul.f32 %v194, %v196
        %v198 = vadd.f32 %v194, %v197
        %vm199 = vweird.f32 %v194
        %v200 = vsel %vm199, %v194, %v198
        %v201 = vmul.f32 %v192, %v200
        %v202 = vmul.f32 %v193, %v200
        %v203 = vfloor.f32 %v201
        %v204 = vfloor.f32 %v202
        %v205 = vmul.f32 %v203, 16.0
        %v206 = vmul.f32 %v204, 16.0
        %v207 = vsub.f32 %v192, %v205
        %v208 = vsub.f32 %v193, %v206
        %s209 = sld [smem:[#allocation4]]
        %v210 = vstv %s209
        %s211 = sld [smem:[#allocation3]]
        %v212 = vstv %s211
        %v213 = vmul.f32 %v212, 0.0
        %v214 = vmul.f32 %v212, %v160
        %v215 = vmul.f32 %v212, %v167
        %v216 = vadd.f32 %v213, 0.0
        %v217 = vadd.f32 %v214, 0.0
        %v218 = vadd.f32 %v215, 0.0
        %s219 = sld [smem:[#allocation3 + $0x31]]
        %v220 = vstv %s219
        %v221 = vmul.f32 %v220, 0.0
        %v222 = vmul.f32 %v220, %v187
        %v223 = vmul.f32 %v220, %v188
        %v224 = vadd.f32 %v216, %v221
        %v225 = vadd.f32 %v217, %v222
        %v226 = vadd.f32 %v218, %v223
        %s227 = sld [smem:[#allocation3 + $0x7]]
        %v228 = vstv %s227
        %v229 = vmul.f32 %v228, 0.0
        %v230 = vmul.f32 %v228, %v160
        %v231 = vmul.f32 %v228, %v167
        %235 = vrot.lane.b32.xlu0 %v229, 112
        %v236 = vpop.permute.xlu0 %235
        %237 = vrot.lane.b32.xlu0 %v230, 112
        %v238 = vpop.permute.xlu0 %237
        %239 = vrot.lane.b32.xlu0 %v231, 112
        %v240 = vpop.permute.xlu0 %239
        %vm241 = vcmask 916480
        %v242 = vsel %vm241, %v236, %v238
        %v243 = vsel %vm241, %v238, %v240
        %v247 = vadd.f32 %v224, %v242
        %v248 = vadd.f32 %v225, %v243
        %v249 = vadd.f32 %v226, %v240
        %s250 = sld [smem:[#allocation3 + $0x38]]
        %v251 = vstv %s250
        %v252 = vmul.f32 %v251, 0.0
        %v253 = vmul.f32 %v251, %v187
        %v254 = vmul.f32 %v251, %v188
        %258 = vrot.lane.b32.xlu0 %v252, 112
        %v259 = vpop.permute.xlu0 %258
        %260 = vrot.lane.b32.xlu0 %v253, 112
        %v261 = vpop.permute.xlu0 %260
        %262 = vrot.lane.b32.xlu0 %v254, 112
        %v263 = vpop.permute.xlu0 %262
        %v264 = vsel %vm241, %v259, %v261
        %v265 = vsel %vm241, %v261, %v263
        %v269 = vadd.f32 %v247, %v264
        %v270 = vadd.f32 %v248, %v265
        %v271 = vadd.f32 %v249, %v263
        %s272 = sld [smem:[#allocation3 + $0xe]]
        %v273 = vstv %s272
        %v274 = vmul.f32 %v273, 0.0
        %v275 = vmul.f32 %v273, %v160
        %v276 = vmul.f32 %v273, %v167
        %280 = vrot.lane.b32.xlu0 %v274, 96
        %v281 = vpop.permute.xlu0 %280
        %282 = vrot.lane.b32.xlu0 %v275, 96
        %v283 = vpop.permute.xlu0 %282
        %284 = vrot.lane.b32.xlu0 %v276, 96
        %v285 = vpop.permute.xlu0 %284
        %vm286 = vcmask 785408
        %v287 = vsel %vm286, %v281, %v283
        %v288 = vsel %vm286, %v283, %v285
        %v292 = vadd.f32 %v269, %v287
        %v293 = vadd.f32 %v270, %v288
        %v294 = vadd.f32 %v271, %v285
        %s295 = sld [smem:[#allocation3 + $0x3f]]
        %v296 = vstv %s295
        %v297 = vmul.f32 %v296, 0.0
        %v298 = vmul.f32 %v296, %v187
        %v299 = vmul.f32 %v296, %v188
        %303 = vrot.lane.b32.xlu0 %v297, 96
        %v304 = vpop.permute.xlu0 %303
        %305 = vrot.lane.b32.xlu0 %v298, 96
        %v306 = vpop.permute.xlu0 %305
        %307 = vrot.lane.b32.xlu0 %v299, 96
        %v308 = vpop.permute.xlu0 %307
        %v309 = vsel %vm286, %v304, %v306
        %v310 = vsel %vm286, %v306, %v308
        %v314 = vadd.f32 %v292, %v309
        %v315 = vadd.f32 %v293, %v310
        %v316 = vadd.f32 %v294, %v308
        %s317 = sld [smem:[#allocation3 + $0x15]]
        %v318 = vstv %s317
        %v319 = vmul.f32 %v318, 0.0
        %v320 = vmul.f32 %v318, %v160
        %v321 = vmul.f32 %v318, %v167
        %325 = vrot.lane.b32.xlu0 %v319, 80
        %v326 = vpop.permute.xlu0 %325
        %327 = vrot.lane.b32.xlu0 %v320, 80
        %v328 = vpop.permute.xlu0 %327
        %329 = vrot.lane.b32.xlu0 %v321, 80
        %v330 = vpop.permute.xlu0 %329
        %vm331 = vcmask 654336
        %v332 = vsel %vm331, %v326, %v328
        %v333 = vsel %vm331, %v328, %v330
        %v337 = vadd.f32 %v314, %v332
        %v338 = vadd.f32 %v315, %v333
        %v339 = vadd.f32 %v316, %v330
        %s340 = sld [smem:[#allocation3 + $0x46]]
        %v341 = vstv %s340
        %v342 = vmul.f32 %v341, 0.0
        %v343 = vmul.f32 %v341, %v187
        %v344 = vmul.f32 %v341, %v188
        %348 = vrot.lane.b32.xlu0 %v342, 80
        %v349 = vpop.permute.xlu0 %348
        %350 = vrot.lane.b32.xlu0 %v343, 80
        %v351 = vpop.permute.xlu0 %350
        %352 = vrot.lane.b32.xlu0 %v344, 80
        %v353 = vpop.permute.xlu0 %352
        %v354 = vsel %vm331, %v349, %v351
        %v355 = vsel %vm331, %v351, %v353
        %v359 = vadd.f32 %v337, %v354
        %v360 = vadd.f32 %v338, %v355
        %v361 = vadd.f32 %v339, %v353
        %s362 = sld [smem:[#allocation3 + $0x1c]]
        %v363 = vstv %s362
        %v364 = vmul.f32 %v363, %v160
        %v365 = vmul.f32 %v363, %v167
        %v366 = vmul.f32 %v363, 0.0
        %370 = vrot.lane.b32.xlu0 %v364, 64
        %v371 = vpop.permute.xlu0 %370
        %372 = vrot.lane.b32.xlu0 %v365, 64
        %v373 = vpop.permute.xlu0 %372
        %374 = vrot.lane.b32.xlu0 %v366, 64
        %v375 = vpop.permute.xlu0 %374
        %vm376 = vcmask 523264
        %v377 = vsel %vm376, %v371, %v373
        %v378 = vsel %vm376, %v373, %v375
        %v382 = vadd.f32 %v359, %v371
        %v383 = vadd.f32 %v360, %v377
        %v384 = vadd.f32 %v361, %v378
        %s385 = sld [smem:[#allocation3 + $0x4d]]
        %v386 = vstv %s385
        %v387 = vmul.f32 %v386, %v187
        %v388 = vmul.f32 %v386, %v188
        %v389 = vmul.f32 %v386, 0.0
        %393 = vrot.lane.b32.xlu0 %v387, 64
        %v394 = vpop.permute.xlu0 %393
        %395 = vrot.lane.b32.xlu0 %v388, 64
        %v396 = vpop.permute.xlu0 %395
        %397 = vrot.lane.b32.xlu0 %v389, 64
        %v398 = vpop.permute.xlu0 %397
        %v399 = vsel %vm376, %v394, %v396
        %v400 = vsel %vm376, %v396, %v398
        %v404 = vadd.f32 %v382, %v394
        %v405 = vadd.f32 %v383, %v399
        %v406 = vadd.f32 %v384, %v400
        %s407 = sld [smem:[#allocation3 + $0x23]]
        %v408 = vstv %s407
        %v409 = vmul.f32 %v408, %v160
        %v410 = vmul.f32 %v408, %v167
        %v411 = vmul.f32 %v408, 0.0
        %415 = vrot.lane.b32.xlu0 %v409, 48
        %v416 = vpop.permute.xlu0 %415
        %417 = vrot.lane.b32.xlu0 %v410, 48
        %v418 = vpop.permute.xlu0 %417
        %419 = vrot.lane.b32.xlu0 %v411, 48
        %v420 = vpop.permute.xlu0 %419
        %vm421 = vcmask 392192
        %v422 = vsel %vm421, %v416, %v418
        %v423 = vsel %vm421, %v418, %v420
        %v427 = vadd.f32 %v404, %v416
        %v428 = vadd.f32 %v405, %v422
        %v429 = vadd.f32 %v406, %v423
        %s430 = sld [smem:[#allocation3 + $0x54]]
        %v431 = vstv %s430
        %v432 = vmul.f32 %v431, %v187
        %v433 = vmul.f32 %v431, %v188
        %v434 = vmul.f32 %v431, 0.0
        %438 = vrot.lane.b32.xlu0 %v432, 48
        %v439 = vpop.permute.xlu0 %438
        %440 = vrot.lane.b32.xlu0 %v433, 48
        %v441 = vpop.permute.xlu0 %440
        %442 = vrot.lane.b32.xlu0 %v434, 48
        %v443 = vpop.permute.xlu0 %442
        %v444 = vsel %vm421, %v439, %v441
        %v445 = vsel %vm421, %v441, %v443
        %v449 = vadd.f32 %v427, %v439
        %v450 = vadd.f32 %v428, %v444
        %v451 = vadd.f32 %v429, %v445
        %s452 = sld [smem:[#allocation3 + $0x2a]]
        %v453 = vstv %s452
        %v454 = vmul.f32 %v453, %v160
        %v455 = vmul.f32 %v453, %v167
        %v456 = vmul.f32 %v453, 0.0
        %460 = vrot.lane.b32.xlu0 %v454, 32
        %v461 = vpop.permute.xlu0 %460
        %462 = vrot.lane.b32.xlu0 %v455, 32
        %v463 = vpop.permute.xlu0 %462
        %464 = vrot.lane.b32.xlu0 %v456, 32
        %v465 = vpop.permute.xlu0 %464
        %vm466 = vcmask 261120
        %v467 = vsel %vm466, %v461, %v463
        %v468 = vsel %vm466, %v463, %v465
        %v472 = vadd.f32 %v449, %v461
        %v473 = vadd.f32 %v450, %v467
        %v474 = vadd.f32 %v451, %v468
        %s475 = sld [smem:[#allocation3 + $0x5b]]
        %v476 = vstv %s475
        %v477 = vmul.f32 %v476, %v187
        %v478 = vmul.f32 %v476, %v188
        %v479 = vmul.f32 %v476, 0.0
        %483 = vrot.lane.b32.xlu0 %v477, 32
        %v484 = vpop.permute.xlu0 %483
        %485 = vrot.lane.b32.xlu0 %v478, 32
        %v486 = vpop.permute.xlu0 %485
        %487 = vrot.lane.b32.xlu0 %v479, 32
        %v488 = vpop.permute.xlu0 %487
        %v489 = vsel %vm466, %v484, %v486
        %v490 = vsel %vm466, %v486, %v488
        %v494 = vadd.f32 %v472, %v484
        %v495 = vadd.f32 %v473, %v489
        %v496 = vadd.f32 %v474, %v490
        %v497 = vadd.f32 %v207, -3.0
        %v498 = vadd.f32 %v208, -3.0
        %vm499 = vcmp.ge.f32.partialorder %v497, 0.0
        %vm500 = vcmp.ge.f32.partialorder %v498, 0.0
        %vm501 = vcmp.lt.f32.partialorder %v497, 16.0
        %vm502 = vcmp.lt.f32.partialorder %v498, 16.0
        %vm503 = vmand %vm499, %vm501
        %vm504 = vmand %vm500, %vm502
        %508 = vrot.lane.b32.xlu0 %v494, 51
        %v509 = vpop.permute.xlu0 %508
        %510 = vrot.lane.b32.xlu0 %v495, 51
        %v511 = vpop.permute.xlu0 %510
        %512 = vrot.lane.b32.xlu0 %v496, 51
        %v513 = vpop.permute.xlu0 %512
        %vm514 = vcmask 416768
        %v515 = vsel %vm514, %v509, %v511
        %v516 = vsel %vm514, %v511, %v513
        %v519 = vsel %vm503, %v515, 0.0
        %v520 = vsel %vm504, %v516, 0.0
        %v521 = vadd.f32 %v210, %v519
        %v522 = vadd.f32 %v210, %v520
        %s523 = sld [smem:[#allocation3 + $0x1]]
        %v524 = vstv %s523
        %v525 = vmul.f32 %v524, 0.0
        %v526 = vmul.f32 %v524, %v160
        %v527 = vmul.f32 %v524, %v167
        %v528 = vadd.f32 %v525, 0.0
        %v529 = vadd.f32 %v526, 0.0
        %v530 = vadd.f32 %v527, 0.0
        %s531 = sld [smem:[#allocation3 + $0x32]]
        %v532 = vstv %s531
        %v533 = vmul.f32 %v532, 0.0
        %v534 = vmul.f32 %v532, %v187
        %v535 = vmul.f32 %v532, %v188
        %v536 = vadd.f32 %v528, %v533
        %v537 = vadd.f32 %v529, %v534
        %v538 = vadd.f32 %v530, %v535
        %s539 = sld [smem:[#allocation3 + $0x8]]
        %v540 = vstv %s539
        %v541 = vmul.f32 %v540, 0.0
        %v542 = vmul.f32 %v540, %v160
        %v543 = vmul.f32 %v540, %v167
        %547 = vrot.lane.b32.xlu0 %v541, 112
        %v548 = vpop.permute.xlu0 %547
        %549 = vrot.lane.b32.xlu0 %v542, 112
        %v550 = vpop.permute.xlu0 %549
        %551 = vrot.lane.b32.xlu0 %v543, 112
        %v552 = vpop.permute.xlu0 %551
        %v553 = vsel %vm241, %v548, %v550
        %v554 = vsel %vm241, %v550, %v552
        %v558 = vadd.f32 %v536, %v553
        %v559 = vadd.f32 %v537, %v554
        %v560 = vadd.f32 %v538, %v552
        %s561 = sld [smem:[#allocation3 + $0x39]]
        %v562 = vstv %s561
        %v563 = vmul.f32 %v562, 0.0
        %v564 = vmul.f32 %v562, %v187
        %v565 = vmul.f32 %v562, %v188
        %569 = vrot.lane.b32.xlu0 %v563, 112
        %v570 = vpop.permute.xlu0 %569
        %571 = vrot.lane.b32.xlu0 %v564, 112
        %v572 = vpop.permute.xlu0 %571
        %573 = vrot.lane.b32.xlu0 %v565, 112
        %v574 = vpop.permute.xlu0 %573
        %v575 = vsel %vm241, %v570, %v572
        %v576 = vsel %vm241, %v572, %v574
        %v580 = vadd.f32 %v558, %v575
        %v581 = vadd.f32 %v559, %v576
        %v582 = vadd.f32 %v560, %v574
        %s583 = sld [smem:[#allocation3 + $0xf]]
        %v584 = vstv %s583
        %v585 = vmul.f32 %v584, 0.0
        %v586 = vmul.f32 %v584, %v160
        %v587 = vmul.f32 %v584, %v167
        %591 = vrot.lane.b32.xlu0 %v585, 96
        %v592 = vpop.permute.xlu0 %591
        %593 = vrot.lane.b32.xlu0 %v586, 96
        %v594 = vpop.permute.xlu0 %593
        %595 = vrot.lane.b32.xlu0 %v587, 96
        %v596 = vpop.permute.xlu0 %595
        %v597 = vsel %vm286, %v592, %v594
        %v598 = vsel %vm286, %v594, %v596
        %v602 = vadd.f32 %v580, %v597
        %v603 = vadd.f32 %v581, %v598
        %v604 = vadd.f32 %v582, %v596
        %s605 = sld [smem:[#allocation3 + $0x40]]
        %v606 = vstv %s605
        %v607 = vmul.f32 %v606, 0.0
        %v608 = vmul.f32 %v606, %v187
        %v609 = vmul.f32 %v606, %v188
        %613 = vrot.lane.b32.xlu0 %v607, 96
        %v614 = vpop.permute.xlu0 %613
        %615 = vrot.lane.b32.xlu0 %v608, 96
        %v616 = vpop.permute.xlu0 %615
        %617 = vrot.lane.b32.xlu0 %v609, 96
        %v618 = vpop.permute.xlu0 %617
        %v619 = vsel %vm286, %v614, %v616
        %v620 = vsel %vm286, %v616, %v618
        %v624 = vadd.f32 %v602, %v619
        %v625 = vadd.f32 %v603, %v620
        %v626 = vadd.f32 %v604, %v618
        %s627 = sld [smem:[#allocation3 + $0x16]]
        %v628 = vstv %s627
        %v629 = vmul.f32 %v628, 0.0
        %v630 = vmul.f32 %v628, %v160
        %v631 = vmul.f32 %v628, %v167
        %635 = vrot.lane.b32.xlu0 %v629, 80
        %v636 = vpop.permute.xlu0 %635
        %637 = vrot.lane.b32.xlu0 %v630, 80
        %v638 = vpop.permute.xlu0 %637
        %639 = vrot.lane.b32.xlu0 %v631, 80
        %v640 = vpop.permute.xlu0 %639
        %v641 = vsel %vm331, %v636, %v638
        %v642 = vsel %vm331, %v638, %v640
        %v646 = vadd.f32 %v624, %v641
        %v647 = vadd.f32 %v625, %v642
        %v648 = vadd.f32 %v626, %v640
        %s649 = sld [smem:[#allocation3 + $0x47]]
        %v650 = vstv %s649
        %v651 = vmul.f32 %v650, 0.0
        %v652 = vmul.f32 %v650, %v187
        %v653 = vmul.f32 %v650, %v188
        %657 = vrot.lane.b32.xlu0 %v651, 80
        %v658 = vpop.permute.xlu0 %657
        %659 = vrot.lane.b32.xlu0 %v652, 80
        %v660 = vpop.permute.xlu0 %659
        %661 = vrot.lane.b32.xlu0 %v653, 80
        %v662 = vpop.permute.xlu0 %661
        %v663 = vsel %vm331, %v658, %v660
        %v664 = vsel %vm331, %v660, %v662
        %v668 = vadd.f32 %v646, %v663
        %v669 = vadd.f32 %v647, %v664
        %v670 = vadd.f32 %v648, %v662
        %s671 = sld [smem:[#allocation3 + $0x1d]]
        %v672 = vstv %s671
        %v673 = vmul.f32 %v672, %v160
        %v674 = vmul.f32 %v672, %v167
        %v675 = vmul.f32 %v672, 0.0
        %679 = vrot.lane.b32.xlu0 %v673, 64
        %v680 = vpop.permute.xlu0 %679
        %681 = vrot.lane.b32.xlu0 %v674, 64
        %v682 = vpop.permute.xlu0 %681
        %683 = vrot.lane.b32.xlu0 %v675, 64
        %v684 = vpop.permute.xlu0 %683
        %v685 = vsel %vm376, %v680, %v682
        %v686 = vsel %vm376, %v682, %v684
        %v690 = vadd.f32 %v668, %v680
        %v691 = vadd.f32 %v669, %v685
        %v692 = vadd.f32 %v670, %v686
        %s693 = sld [smem:[#allocation3 + $0x4e]]
        %v694 = vstv %s693
        %v695 = vmul.f32 %v694, %v187
        %v696 = vmul.f32 %v694, %v188
        %v697 = vmul.f32 %v694, 0.0
        %701 = vrot.lane.b32.xlu0 %v695, 64
        %v702 = vpop.permute.xlu0 %701
        %703 = vrot.lane.b32.xlu0 %v696, 64
        %v704 = vpop.permute.xlu0 %703
        %705 = vrot.lane.b32.xlu0 %v697, 64
        %v706 = vpop.permute.xlu0 %705
        %v707 = vsel %vm376, %v702, %v704
        %v708 = vsel %vm376, %v704, %v706
        %v712 = vadd.f32 %v690, %v702
        %v713 = vadd.f32 %v691, %v707
        %v714 = vadd.f32 %v692, %v708
        %s715 = sld [smem:[#allocation3 + $0x24]]
        %v716 = vstv %s715
        %v717 = vmul.f32 %v716, %v160
        %v718 = vmul.f32 %v716, %v167
        %v719 = vmul.f32 %v716, 0.0
        %723 = vrot.lane.b32.xlu0 %v717, 48
        %v724 = vpop.permute.xlu0 %723
        %725 = vrot.lane.b32.xlu0 %v718, 48
        %v726 = vpop.permute.xlu0 %725
        %727 = vrot.lane.b32.xlu0 %v719, 48
        %v728 = vpop.permute.xlu0 %727
        %v729 = vsel %vm421, %v724, %v726
        %v730 = vsel %vm421, %v726, %v728
        %v734 = vadd.f32 %v712, %v724
        %v735 = vadd.f32 %v713, %v729
        %v736 = vadd.f32 %v714, %v730
        %s737 = sld [smem:[#allocation3 + $0x55]]
        %v738 = vstv %s737
        %v739 = vmul.f32 %v738, %v187
        %v740 = vmul.f32 %v738, %v188
        %v741 = vmul.f32 %v738, 0.0
        %745 = vrot.lane.b32.xlu0 %v739, 48
        %v746 = vpop.permute.xlu0 %745
        %747 = vrot.lane.b32.xlu0 %v740, 48
        %v748 = vpop.permute.xlu0 %747
        %749 = vrot.lane.b32.xlu0 %v741, 48
        %v750 = vpop.permute.xlu0 %749
        %v751 = vsel %vm421, %v746, %v748
        %v752 = vsel %vm421, %v748, %v750
        %v756 = vadd.f32 %v734, %v746
        %v757 = vadd.f32 %v735, %v751
        %v758 = vadd.f32 %v736, %v752
        %s759 = sld [smem:[#allocation3 + $0x2b]]
        %v760 = vstv %s759
        %v761 = vmul.f32 %v760, %v160
        %v762 = vmul.f32 %v760, %v167
        %v763 = vmul.f32 %v760, 0.0
        %767 = vrot.lane.b32.xlu0 %v761, 32
        %v768 = vpop.permute.xlu0 %767
        %769 = vrot.lane.b32.xlu0 %v762, 32
        %v770 = vpop.permute.xlu0 %769
        %771 = vrot.lane.b32.xlu0 %v763, 32
        %v772 = vpop.permute.xlu0 %771
        %v773 = vsel %vm466, %v768, %v770
        %v774 = vsel %vm466, %v770, %v772
        %v778 = vadd.f32 %v756, %v768
        %v779 = vadd.f32 %v757, %v773
        %v780 = vadd.f32 %v758, %v774
        %s781 = sld [smem:[#allocation3 + $0x5c]]
        %v782 = vstv %s781
        %v783 = vmul.f32 %v782, %v187
        %v784 = vmul.f32 %v782, %v188
        %v785 = vmul.f32 %v782, 0.0
        %789 = vrot.lane.b32.xlu0 %v783, 32
        %v790 = vpop.permute.xlu0 %789
        %791 = vrot.lane.b32.xlu0 %v784, 32
        %v792 = vpop.permute.xlu0 %791
        %793 = vrot.lane.b32.xlu0 %v785, 32
        %v794 = vpop.permute.xlu0 %793
        %v795 = vsel %vm466, %v790, %v792
        %v796 = vsel %vm466, %v792, %v794
        %v800 = vadd.f32 %v778, %v790
        %v801 = vadd.f32 %v779, %v795
        %v802 = vadd.f32 %v780, %v796
        %v803 = vadd.f32 %v207, -2.0
        %v804 = vadd.f32 %v208, -2.0
        %vm805 = vcmp.ge.f32.partialorder %v803, 0.0
        %vm806 = vcmp.ge.f32.partialorder %v804, 0.0
        %vm807 = vcmp.lt.f32.partialorder %v803, 16.0
        %vm808 = vcmp.lt.f32.partialorder %v804, 16.0
        %vm809 = vmand %vm805, %vm807
        %vm810 = vmand %vm806, %vm808
        %814 = vrot.lane.b32.xlu0 %v800, 50
        %v815 = vpop.permute.xlu0 %814
        %816 = vrot.lane.b32.xlu0 %v801, 50
        %v817 = vpop.permute.xlu0 %816
        %818 = vrot.lane.b32.xlu0 %v802, 50
        %v819 = vpop.permute.xlu0 %818
        %vm820 = vcmask 408576
        %v821 = vsel %vm820, %v815, %v817
        %v822 = vsel %vm820, %v817, %v819
        %v825 = vsel %vm809, %v821, 0.0
        %v826 = vsel %vm810, %v822, 0.0
        %v827 = vadd.f32 %v521, %v825
        %v828 = vadd.f32 %v522, %v826
        %s829 = sld [smem:[#allocation3 + $0x2]]
        %v830 = vstv %s829
        %v831 = vmul.f32 %v830, 0.0
        %v832 = vmul.f32 %v830, %v160
        %v833 = vmul.f32 %v830, %v167
        %v834 = vadd.f32 %v831, 0.0
        %v835 = vadd.f32 %v832, 0.0
        %v836 = vadd.f32 %v833, 0.0
        %s837 = sld [smem:[#allocation3 + $0x33]]
        %v838 = vstv %s837
        %v839 = vmul.f32 %v838, 0.0
        %v840 = vmul.f32 %v838, %v187
        %v841 = vmul.f32 %v838, %v188
        %v842 = vadd.f32 %v834, %v839
        %v843 = vadd.f32 %v835, %v840
        %v844 = vadd.f32 %v836, %v841
        %s845 = sld [smem:[#allocation3 + $0x9]]
        %v846 = vstv %s845
        %v847 = vmul.f32 %v846, 0.0
        %v848 = vmul.f32 %v846, %v160
        %v849 = vmul.f32 %v846, %v167
        %853 = vrot.lane.b32.xlu0 %v847, 112
        %v854 = vpop.permute.xlu0 %853
        %855 = vrot.lane.b32.xlu0 %v848, 112
        %v856 = vpop.permute.xlu0 %855
        %857 = vrot.lane.b32.xlu0 %v849, 112
        %v858 = vpop.permute.xlu0 %857
        %v859 = vsel %vm241, %v854, %v856
        %v860 = vsel %vm241, %v856, %v858
        %v864 = vadd.f32 %v842, %v859
        %v865 = vadd.f32 %v843, %v860
        %v866 = vadd.f32 %v844, %v858
        %s867 = sld [smem:[#allocation3 + $0x3a]]
        %v868 = vstv %s867
        %v869 = vmul.f32 %v868, 0.0
        %v870 = vmul.f32 %v868, %v187
        %v871 = vmul.f32 %v868, %v188
        %875 = vrot.lane.b32.xlu0 %v869, 112
        %v876 = vpop.permute.xlu0 %875
        %877 = vrot.lane.b32.xlu0 %v870, 112
        %v878 = vpop.permute.xlu0 %877
        %879 = vrot.lane.b32.xlu0 %v871, 112
        %v880 = vpop.permute.xlu0 %879
        %v881 = vsel %vm241, %v876, %v878
        %v882 = vsel %vm241, %v878, %v880
        %v886 = vadd.f32 %v864, %v881
        %v887 = vadd.f32 %v865, %v882
        %v888 = vadd.f32 %v866, %v880
        %s889 = sld [smem:[#allocation3 + $0x10]]
        %v890 = vstv %s889
        %v891 = vmul.f32 %v890, 0.0
        %v892 = vmul.f32 %v890, %v160
        %v893 = vmul.f32 %v890, %v167
        %897 = vrot.lane.b32.xlu0 %v891, 96
        %v898 = vpop.permute.xlu0 %897
        %899 = vrot.lane.b32.xlu0 %v892, 96
        %v900 = vpop.permute.xlu0 %899
        %901 = vrot.lane.b32.xlu0 %v893, 96
        %v902 = vpop.permute.xlu0 %901
        %v903 = vsel %vm286, %v898, %v900
        %v904 = vsel %vm286, %v900, %v902
        %v908 = vadd.f32 %v886, %v903
        %v909 = vadd.f32 %v887, %v904
        %v910 = vadd.f32 %v888, %v902
        %s911 = sld [smem:[#allocation3 + $0x41]]
        %v912 = vstv %s911
        %v913 = vmul.f32 %v912, 0.0
        %v914 = vmul.f32 %v912, %v187
        %v915 = vmul.f32 %v912, %v188
        %919 = vrot.lane.b32.xlu0 %v913, 96
        %v920 = vpop.permute.xlu0 %919
        %921 = vrot.lane.b32.xlu0 %v914, 96
        %v922 = vpop.permute.xlu0 %921
        %923 = vrot.lane.b32.xlu0 %v915, 96
        %v924 = vpop.permute.xlu0 %923
        %v925 = vsel %vm286, %v920, %v922
        %v926 = vsel %vm286, %v922, %v924
        %v930 = vadd.f32 %v908, %v925
        %v931 = vadd.f32 %v909, %v926
        %v932 = vadd.f32 %v910, %v924
        %s933 = sld [smem:[#allocation3 + $0x17]]
        %v934 = vstv %s933
        %v935 = vmul.f32 %v934, 0.0
        %v936 = vmul.f32 %v934, %v160
        %v937 = vmul.f32 %v934, %v167
        %941 = vrot.lane.b32.xlu0 %v935, 80
        %v942 = vpop.permute.xlu0 %941
        %943 = vrot.lane.b32.xlu0 %v936, 80
        %v944 = vpop.permute.xlu0 %943
        %945 = vrot.lane.b32.xlu0 %v937, 80
        %v946 = vpop.permute.xlu0 %945
        %v947 = vsel %vm331, %v942, %v944
        %v948 = vsel %vm331, %v944, %v946
        %v952 = vadd.f32 %v930, %v947
        %v953 = vadd.f32 %v931, %v948
        %v954 = vadd.f32 %v932, %v946
        %s955 = sld [smem:[#allocation3 + $0x48]]
        %v956 = vstv %s955
        %v957 = vmul.f32 %v956, 0.0
        %v958 = vmul.f32 %v956, %v187
        %v959 = vmul.f32 %v956, %v188
        %963 = vrot.lane.b32.xlu0 %v957, 80
        %v964 = vpop.permute.xlu0 %963
        %965 = vrot.lane.b32.xlu0 %v958, 80
        %v966 = vpop.permute.xlu0 %965
        %967 = vrot.lane.b32.xlu0 %v959, 80
        %v968 = vpop.permute.xlu0 %967
        %v969 = vsel %vm331, %v964, %v966
        %v970 = vsel %vm331, %v966, %v968
        %v974 = vadd.f32 %v952, %v969
        %v975 = vadd.f32 %v953, %v970
        %v976 = vadd.f32 %v954, %v968
        %s977 = sld [smem:[#allocation3 + $0x1e]]
        %v978 = vstv %s977
        %v979 = vmul.f32 %v978, %v160
        %v980 = vmul.f32 %v978, %v167
        %v981 = vmul.f32 %v978, 0.0
        %985 = vrot.lane.b32.xlu0 %v979, 64
        %v986 = vpop.permute.xlu0 %985
        %987 = vrot.lane.b32.xlu0 %v980, 64
        %v988 = vpop.permute.xlu0 %987
        %989 = vrot.lane.b32.xlu0 %v981, 64
        %v990 = vpop.permute.xlu0 %989
        %v991 = vsel %vm376, %v986, %v988
        %v992 = vsel %vm376, %v988, %v990
        %v996 = vadd.f32 %v974, %v986
        %v997 = vadd.f32 %v975, %v991
        %v998 = vadd.f32 %v976, %v992
        %s999 = sld [smem:[#allocation3 + $0x4f]]
        %v1000 = vstv %s999
        %v1001 = vmul.f32 %v1000, %v187
        %v1002 = vmul.f32 %v1000, %v188
        %v1003 = vmul.f32 %v1000, 0.0
        %1007 = vrot.lane.b32.xlu0 %v1001, 64
        %v1008 = vpop.permute.xlu0 %1007
        %1009 = vrot.lane.b32.xlu0 %v1002, 64
        %v1010 = vpop.permute.xlu0 %1009
        %1011 = vrot.lane.b32.xlu0 %v1003, 64
        %v1012 = vpop.permute.xlu0 %1011
        %v1013 = vsel %vm376, %v1008, %v1010
        %v1014 = vsel %vm376, %v1010, %v1012
        %v1018 = vadd.f32 %v996, %v1008
        %v1019 = vadd.f32 %v997, %v1013
        %v1020 = vadd.f32 %v998, %v1014
        %s1021 = sld [smem:[#allocation3 + $0x25]]
        %v1022 = vstv %s1021
        %v1023 = vmul.f32 %v1022, %v160
        %v1024 = vmul.f32 %v1022, %v167
        %v1025 = vmul.f32 %v1022, 0.0
        %1029 = vrot.lane.b32.xlu0 %v1023, 48
        %v1030 = vpop.permute.xlu0 %1029
        %1031 = vrot.lane.b32.xlu0 %v1024, 48
        %v1032 = vpop.permute.xlu0 %1031
        %1033 = vrot.lane.b32.xlu0 %v1025, 48
        %v1034 = vpop.permute.xlu0 %1033
        %v1035 = vsel %vm421, %v1030, %v1032
        %v1036 = vsel %vm421, %v1032, %v1034
        %v1040 = vadd.f32 %v1018, %v1030
        %v1041 = vadd.f32 %v1019, %v1035
        %v1042 = vadd.f32 %v1020, %v1036
        %s1043 = sld [smem:[#allocation3 + $0x56]]
        %v1044 = vstv %s1043
        %v1045 = vmul.f32 %v1044, %v187
        %v1046 = vmul.f32 %v1044, %v188
        %v1047 = vmul.f32 %v1044, 0.0
        %1051 = vrot.lane.b32.xlu0 %v1045, 48
        %v1052 = vpop.permute.xlu0 %1051
        %1053 = vrot.lane.b32.xlu0 %v1046, 48
        %v1054 = vpop.permute.xlu0 %1053
        %1055 = vrot.lane.b32.xlu0 %v1047, 48
        %v1056 = vpop.permute.xlu0 %1055
        %v1057 = vsel %vm421, %v1052, %v1054
        %v1058 = vsel %vm421, %v1054, %v1056
        %v1062 = vadd.f32 %v1040, %v1052
        %v1063 = vadd.f32 %v1041, %v1057
        %v1064 = vadd.f32 %v1042, %v1058
        %s1065 = sld [smem:[#allocation3 + $0x2c]]
        %v1066 = vstv %s1065
        %v1067 = vmul.f32 %v1066, %v160
        %v1068 = vmul.f32 %v1066, %v167
        %v1069 = vmul.f32 %v1066, 0.0
        %1073 = vrot.lane.b32.xlu0 %v1067, 32
        %v1074 = vpop.permute.xlu0 %1073
        %1075 = vrot.lane.b32.xlu0 %v1068, 32
        %v1076 = vpop.permute.xlu0 %1075
        %1077 = vrot.lane.b32.xlu0 %v1069, 32
        %v1078 = vpop.permute.xlu0 %1077
        %v1079 = vsel %vm466, %v1074, %v1076
        %v1080 = vsel %vm466, %v1076, %v1078
        %v1084 = vadd.f32 %v1062, %v1074
        %v1085 = vadd.f32 %v1063, %v1079
        %v1086 = vadd.f32 %v1064, %v1080
        %s1087 = sld [smem:[#allocation3 + $0x5d]]
        %v1088 = vstv %s1087
        %v1089 = vmul.f32 %v1088, %v187
        %v1090 = vmul.f32 %v1088, %v188
        %v1091 = vmul.f32 %v1088, 0.0
        %1095 = vrot.lane.b32.xlu0 %v1089, 32
        %v1096 = vpop.permute.xlu0 %1095
        %1097 = vrot.lane.b32.xlu0 %v1090, 32
        %v1098 = vpop.permute.xlu0 %1097
        %1099 = vrot.lane.b32.xlu0 %v1091, 32
        %v1100 = vpop.permute.xlu0 %1099
        %v1101 = vsel %vm466, %v1096, %v1098
        %v1102 = vsel %vm466, %v1098, %v1100
        %v1106 = vadd.f32 %v1084, %v1096
        %v1107 = vadd.f32 %v1085, %v1101
        %v1108 = vadd.f32 %v1086, %v1102
        %v1109 = vadd.f32 %v207, -1.0
        %v1110 = vadd.f32 %v208, -1.0
        %vm1111 = vcmp.ge.f32.partialorder %v1109, 0.0
        %vm1112 = vcmp.ge.f32.partialorder %v1110, 0.0
        %vm1113 = vcmp.lt.f32.partialorder %v1109, 16.0
        %vm1114 = vcmp.lt.f32.partialorder %v1110, 16.0
        %vm1115 = vmand %vm1111, %vm1113
        %vm1116 = vmand %vm1112, %vm1114
        %1120 = vrot.lane.b32.xlu0 %v1106, 49
        %v1121 = vpop.permute.xlu0 %1120
        %1122 = vrot.lane.b32.xlu0 %v1107, 49
        %v1123 = vpop.permute.xlu0 %1122
        %1124 = vrot.lane.b32.xlu0 %v1108, 49
        %v1125 = vpop.permute.xlu0 %1124
        %vm1126 = vcmask 400384
        %v1127 = vsel %vm1126, %v1121, %v1123
        %v1128 = vsel %vm1126, %v1123, %v1125
        %v1131 = vsel %vm1115, %v1127, 0.0
        %v1132 = vsel %vm1116, %v1128, 0.0
        %v1133 = vadd.f32 %v827, %v1131
        %v1134 = vadd.f32 %v828, %v1132
        %s1135 = sld [smem:[#allocation3 + $0x3]]
        %v1136 = vstv %s1135
        %v1137 = vmul.f32 %v1136, 0.0
        %v1138 = vmul.f32 %v1136, %v160
        %v1139 = vmul.f32 %v1136, %v167
        %v1140 = vadd.f32 %v1137, 0.0
        %v1141 = vadd.f32 %v1138, 0.0
        %v1142 = vadd.f32 %v1139, 0.0
        %s1143 = sld [smem:[#allocation3 + $0x34]]
        %v1144 = vstv %s1143
        %v1145 = vmul.f32 %v1144, 0.0
        %v1146 = vmul.f32 %v1144, %v187
        %v1147 = vmul.f32 %v1144, %v188
        %v1148 = vadd.f32 %v1140, %v1145
        %v1149 = vadd.f32 %v1141, %v1146
        %v1150 = vadd.f32 %v1142, %v1147
        %s1151 = sld [smem:[#allocation3 + $0xa]]
        %v1152 = vstv %s1151
        %v1153 = vmul.f32 %v1152, 0.0
        %v1154 = vmul.f32 %v1152, %v160
        %v1155 = vmul.f32 %v1152, %v167
        %1159 = vrot.lane.b32.xlu0 %v1153, 112
        %v1160 = vpop.permute.xlu0 %1159
        %1161 = vrot.lane.b32.xlu0 %v1154, 112
        %v1162 = vpop.permute.xlu0 %1161
        %1163 = vrot.lane.b32.xlu0 %v1155, 112
        %v1164 = vpop.permute.xlu0 %1163
        %v1165 = vsel %vm241, %v1160, %v1162
        %v1166 = vsel %vm241, %v1162, %v1164
        %v1170 = vadd.f32 %v1148, %v1165
        %v1171 = vadd.f32 %v1149, %v1166
        %v1172 = vadd.f32 %v1150, %v1164
        %s1173 = sld [smem:[#allocation3 + $0x3b]]
        %v1174 = vstv %s1173
        %v1175 = vmul.f32 %v1174, 0.0
        %v1176 = vmul.f32 %v1174, %v187
        %v1177 = vmul.f32 %v1174, %v188
        %1181 = vrot.lane.b32.xlu0 %v1175, 112
        %v1182 = vpop.permute.xlu0 %1181
        %1183 = vrot.lane.b32.xlu0 %v1176, 112
        %v1184 = vpop.permute.xlu0 %1183
        %1185 = vrot.lane.b32.xlu0 %v1177, 112
        %v1186 = vpop.permute.xlu0 %1185
        %v1187 = vsel %vm241, %v1182, %v1184
        %v1188 = vsel %vm241, %v1184, %v1186
        %v1192 = vadd.f32 %v1170, %v1187
        %v1193 = vadd.f32 %v1171, %v1188
        %v1194 = vadd.f32 %v1172, %v1186
        %s1195 = sld [smem:[#allocation3 + $0x11]]
        %v1196 = vstv %s1195
        %v1197 = vmul.f32 %v1196, 0.0
        %v1198 = vmul.f32 %v1196, %v160
        %v1199 = vmul.f32 %v1196, %v167
        %1203 = vrot.lane.b32.xlu0 %v1197, 96
        %v1204 = vpop.permute.xlu0 %1203
        %1205 = vrot.lane.b32.xlu0 %v1198, 96
        %v1206 = vpop.permute.xlu0 %1205
        %1207 = vrot.lane.b32.xlu0 %v1199, 96
        %v1208 = vpop.permute.xlu0 %1207
        %v1209 = vsel %vm286, %v1204, %v1206
        %v1210 = vsel %vm286, %v1206, %v1208
        %v1214 = vadd.f32 %v1192, %v1209
        %v1215 = vadd.f32 %v1193, %v1210
        %v1216 = vadd.f32 %v1194, %v1208
        %s1217 = sld [smem:[#allocation3 + $0x42]]
        %v1218 = vstv %s1217
        %v1219 = vmul.f32 %v1218, 0.0
        %v1220 = vmul.f32 %v1218, %v187
        %v1221 = vmul.f32 %v1218, %v188
        %1225 = vrot.lane.b32.xlu0 %v1219, 96
        %v1226 = vpop.permute.xlu0 %1225
        %1227 = vrot.lane.b32.xlu0 %v1220, 96
        %v1228 = vpop.permute.xlu0 %1227
        %1229 = vrot.lane.b32.xlu0 %v1221, 96
        %v1230 = vpop.permute.xlu0 %1229
        %v1231 = vsel %vm286, %v1226, %v1228
        %v1232 = vsel %vm286, %v1228, %v1230
        %v1236 = vadd.f32 %v1214, %v1231
        %v1237 = vadd.f32 %v1215, %v1232
        %v1238 = vadd.f32 %v1216, %v1230
        %s1239 = sld [smem:[#allocation3 + $0x18]]
        %v1240 = vstv %s1239
        %v1241 = vmul.f32 %v1240, %v160
        %v1242 = vmul.f32 %v1240, %v167
        %1245 = vrot.lane.b32.xlu0 %v1241, 80
        %v1246 = vpop.permute.xlu0 %1245
        %1247 = vrot.lane.b32.xlu0 %v1242, 80
        %v1248 = vpop.permute.xlu0 %1247
        %v1249 = vsel %vm331, %v1246, %v1248
        %v1253 = vadd.f32 %v1236, %v1246
        %v1254 = vadd.f32 %v1237, %v1249
        %v1255 = vadd.f32 %v1238, %v1248
        %s1256 = sld [smem:[#allocation3 + $0x49]]
        %v1257 = vstv %s1256
        %v1258 = vmul.f32 %v1257, %v187
        %v1259 = vmul.f32 %v1257, %v188
        %1262 = vrot.lane.b32.xlu0 %v1258, 80
        %v1263 = vpop.permute.xlu0 %1262
        %1264 = vrot.lane.b32.xlu0 %v1259, 80
        %v1265 = vpop.permute.xlu0 %1264
        %v1266 = vsel %vm331, %v1263, %v1265
        %v1270 = vadd.f32 %v1253, %v1263
        %v1271 = vadd.f32 %v1254, %v1266
        %v1272 = vadd.f32 %v1255, %v1265
        %s1273 = sld [smem:[#allocation3 + $0x1f]]
        %v1274 = vstv %s1273
        %v1275 = vmul.f32 %v1274, %v160
        %v1276 = vmul.f32 %v1274, %v167
        %v1277 = vmul.f32 %v1274, 0.0
        %1281 = vrot.lane.b32.xlu0 %v1275, 64
        %v1282 = vpop.permute.xlu0 %1281
        %1283 = vrot.lane.b32.xlu0 %v1276, 64
        %v1284 = vpop.permute.xlu0 %1283
        %1285 = vrot.lane.b32.xlu0 %v1277, 64
        %v1286 = vpop.permute.xlu0 %1285
        %v1287 = vsel %vm376, %v1282, %v1284
        %v1288 = vsel %vm376, %v1284, %v1286
        %v1292 = vadd.f32 %v1270, %v1282
        %v1293 = vadd.f32 %v1271, %v1287
        %v1294 = vadd.f32 %v1272, %v1288
        %s1295 = sld [smem:[#allocation3 + $0x50]]
        %v1296 = vstv %s1295
        %v1297 = vmul.f32 %v1296, %v187
        %v1298 = vmul.f32 %v1296, %v188
        %v1299 = vmul.f32 %v1296, 0.0
        %1303 = vrot.lane.b32.xlu0 %v1297, 64
        %v1304 = vpop.permute.xlu0 %1303
        %1305 = vrot.lane.b32.xlu0 %v1298, 64
        %v1306 = vpop.permute.xlu0 %1305
        %1307 = vrot.lane.b32.xlu0 %v1299, 64
        %v1308 = vpop.permute.xlu0 %1307
        %v1309 = vsel %vm376, %v1304, %v1306
        %v1310 = vsel %vm376, %v1306, %v1308
        %v1314 = vadd.f32 %v1292, %v1304
        %v1315 = vadd.f32 %v1293, %v1309
        %v1316 = vadd.f32 %v1294, %v1310
        %s1317 = sld [smem:[#allocation3 + $0x26]]
        %v1318 = vstv %s1317
        %v1319 = vmul.f32 %v1318, %v160
        %v1320 = vmul.f32 %v1318, %v167
        %v1321 = vmul.f32 %v1318, 0.0
        %1325 = vrot.lane.b32.xlu0 %v1319, 48
        %v1326 = vpop.permute.xlu0 %1325
        %1327 = vrot.lane.b32.xlu0 %v1320, 48
        %v1328 = vpop.permute.xlu0 %1327
        %1329 = vrot.lane.b32.xlu0 %v1321, 48
        %v1330 = vpop.permute.xlu0 %1329
        %v1331 = vsel %vm421, %v1326, %v1328
        %v1332 = vsel %vm421, %v1328, %v1330
        %v1336 = vadd.f32 %v1314, %v1326
        %v1337 = vadd.f32 %v1315, %v1331
        %v1338 = vadd.f32 %v1316, %v1332
        %s1339 = sld [smem:[#allocation3 + $0x57]]
        %v1340 = vstv %s1339
        %v1341 = vmul.f32 %v1340, %v187
        %v1342 = vmul.f32 %v1340, %v188
        %v1343 = vmul.f32 %v1340, 0.0
        %1347 = vrot.lane.b32.xlu0 %v1341, 48
        %v1348 = vpop.permute.xlu0 %1347
        %1349 = vrot.lane.b32.xlu0 %v1342, 48
        %v1350 = vpop.permute.xlu0 %1349
        %1351 = vrot.lane.b32.xlu0 %v1343, 48
        %v1352 = vpop.permute.xlu0 %1351
        %v1353 = vsel %vm421, %v1348, %v1350
        %v1354 = vsel %vm421, %v1350, %v1352
        %v1358 = vadd.f32 %v1336, %v1348
        %v1359 = vadd.f32 %v1337, %v1353
        %v1360 = vadd.f32 %v1338, %v1354
        %s1361 = sld [smem:[#allocation3 + $0x2d]]
        %v1362 = vstv %s1361
        %v1363 = vmul.f32 %v1362, %v160
        %v1364 = vmul.f32 %v1362, %v167
        %v1365 = vmul.f32 %v1362, 0.0
        %1369 = vrot.lane.b32.xlu0 %v1363, 32
        %v1370 = vpop.permute.xlu0 %1369
        %1371 = vrot.lane.b32.xlu0 %v1364, 32
        %v1372 = vpop.permute.xlu0 %1371
        %1373 = vrot.lane.b32.xlu0 %v1365, 32
        %v1374 = vpop.permute.xlu0 %1373
        %v1375 = vsel %vm466, %v1370, %v1372
        %v1376 = vsel %vm466, %v1372, %v1374
        %v1380 = vadd.f32 %v1358, %v1370
        %v1381 = vadd.f32 %v1359, %v1375
        %v1382 = vadd.f32 %v1360, %v1376
        %s1383 = sld [smem:[#allocation3 + $0x5e]]
        %v1384 = vstv %s1383
        %v1385 = vmul.f32 %v1384, %v187
        %v1386 = vmul.f32 %v1384, %v188
        %v1387 = vmul.f32 %v1384, 0.0
        %1391 = vrot.lane.b32.xlu0 %v1385, 32
        %v1392 = vpop.permute.xlu0 %1391
        %1393 = vrot.lane.b32.xlu0 %v1386, 32
        %v1394 = vpop.permute.xlu0 %1393
        %1395 = vrot.lane.b32.xlu0 %v1387, 32
        %v1396 = vpop.permute.xlu0 %1395
        %v1397 = vsel %vm466, %v1392, %v1394
        %v1398 = vsel %vm466, %v1394, %v1396
        %v1402 = vadd.f32 %v1380, %v1392
        %v1403 = vadd.f32 %v1381, %v1397
        %v1404 = vadd.f32 %v1382, %v1398
        %1408 = vrot.lane.b32.xlu0 %v1402, 48
        %v1409 = vpop.permute.xlu0 %1408
        %1410 = vrot.lane.b32.xlu0 %v1403, 48
        %v1411 = vpop.permute.xlu0 %1410
        %1412 = vrot.lane.b32.xlu0 %v1404, 48
        %v1413 = vpop.permute.xlu0 %1412
        %v1414 = vsel %vm421, %v1409, %v1411
        %v1415 = vsel %vm421, %v1411, %v1413
        %v1418 = vadd.f32 %v1133, %v1414
        %v1419 = vadd.f32 %v1134, %v1415
        %s1420 = sld [smem:[#allocation3 + $0x4]]
        %v1421 = vstv %s1420
        %v1422 = vmul.f32 %v1421, 0.0
        %v1423 = vmul.f32 %v1421, %v160
        %v1424 = vmul.f32 %v1421, %v167
        %v1425 = vadd.f32 %v1422, 0.0
        %v1426 = vadd.f32 %v1423, 0.0
        %v1427 = vadd.f32 %v1424, 0.0
        %s1428 = sld [smem:[#allocation3 + $0x35]]
        %v1429 = vstv %s1428
        %v1430 = vmul.f32 %v1429, 0.0
        %v1431 = vmul.f32 %v1429, %v187
        %v1432 = vmul.f32 %v1429, %v188
        %v1433 = vadd.f32 %v1425, %v1430
        %v1434 = vadd.f32 %v1426, %v1431
        %v1435 = vadd.f32 %v1427, %v1432
        %s1436 = sld [smem:[#allocation3 + $0xb]]
        %v1437 = vstv %s1436
        %v1438 = vmul.f32 %v1437, 0.0
        %v1439 = vmul.f32 %v1437, %v160
        %v1440 = vmul.f32 %v1437, %v167
        %1444 = vrot.lane.b32.xlu0 %v1438, 112
        %v1445 = vpop.permute.xlu0 %1444
        %1446 = vrot.lane.b32.xlu0 %v1439, 112
        %v1447 = vpop.permute.xlu0 %1446
        %1448 = vrot.lane.b32.xlu0 %v1440, 112
        %v1449 = vpop.permute.xlu0 %1448
        %v1450 = vsel %vm241, %v1445, %v1447
        %v1451 = vsel %vm241, %v1447, %v1449
        %v1455 = vadd.f32 %v1433, %v1450
        %v1456 = vadd.f32 %v1434, %v1451
        %v1457 = vadd.f32 %v1435, %v1449
        %s1458 = sld [smem:[#allocation3 + $0x3c]]
        %v1459 = vstv %s1458
        %v1460 = vmul.f32 %v1459, 0.0
        %v1461 = vmul.f32 %v1459, %v187
        %v1462 = vmul.f32 %v1459, %v188
        %1466 = vrot.lane.b32.xlu0 %v1460, 112
        %v1467 = vpop.permute.xlu0 %1466
        %1468 = vrot.lane.b32.xlu0 %v1461, 112
        %v1469 = vpop.permute.xlu0 %1468
        %1470 = vrot.lane.b32.xlu0 %v1462, 112
        %v1471 = vpop.permute.xlu0 %1470
        %v1472 = vsel %vm241, %v1467, %v1469
        %v1473 = vsel %vm241, %v1469, %v1471
        %v1477 = vadd.f32 %v1455, %v1472
        %v1478 = vadd.f32 %v1456, %v1473
        %v1479 = vadd.f32 %v1457, %v1471
        %s1480 = sld [smem:[#allocation3 + $0x12]]
        %v1481 = vstv %s1480
        %v1482 = vmul.f32 %v1481, 0.0
        %v1483 = vmul.f32 %v1481, %v160
        %v1484 = vmul.f32 %v1481, %v167
        %1488 = vrot.lane.b32.xlu0 %v1482, 96
        %v1489 = vpop.permute.xlu0 %1488
        %1490 = vrot.lane.b32.xlu0 %v1483, 96
        %v1491 = vpop.permute.xlu0 %1490
        %1492 = vrot.lane.b32.xlu0 %v1484, 96
        %v1493 = vpop.permute.xlu0 %1492
        %v1494 = vsel %vm286, %v1489, %v1491
        %v1495 = vsel %vm286, %v1491, %v1493
        %v1499 = vadd.f32 %v1477, %v1494
        %v1500 = vadd.f32 %v1478, %v1495
        %v1501 = vadd.f32 %v1479, %v1493
        %s1502 = sld [smem:[#allocation3 + $0x43]]
        %v1503 = vstv %s1502
        %v1504 = vmul.f32 %v1503, 0.0
        %v1505 = vmul.f32 %v1503, %v187
        %v1506 = vmul.f32 %v1503, %v188
        %1510 = vrot.lane.b32.xlu0 %v1504, 96
        %v1511 = vpop.permute.xlu0 %1510
        %1512 = vrot.lane.b32.xlu0 %v1505, 96
        %v1513 = vpop.permute.xlu0 %1512
        %1514 = vrot.lane.b32.xlu0 %v1506, 96
        %v1515 = vpop.permute.xlu0 %1514
        %v1516 = vsel %vm286, %v1511, %v1513
        %v1517 = vsel %vm286, %v1513, %v1515
        %v1521 = vadd.f32 %v1499, %v1516
        %v1522 = vadd.f32 %v1500, %v1517
        %v1523 = vadd.f32 %v1501, %v1515
        %s1524 = sld [smem:[#allocation3 + $0x19]]
        %v1525 = vstv %s1524
        %v1526 = vmul.f32 %v1525, %v160
        %v1527 = vmul.f32 %v1525, %v167
        %v1528 = vmul.f32 %v1525, 0.0
        %1532 = vrot.lane.b32.xlu0 %v1526, 80
        %v1533 = vpop.permute.xlu0 %1532
        %1534 = vrot.lane.b32.xlu0 %v1527, 80
        %v1535 = vpop.permute.xlu0 %1534
        %1536 = vrot.lane.b32.xlu0 %v1528, 80
        %v1537 = vpop.permute.xlu0 %1536
        %v1538 = vsel %vm331, %v1533, %v1535
        %v1539 = vsel %vm331, %v1535, %v1537
        %v1543 = vadd.f32 %v1521, %v1533
        %v1544 = vadd.f32 %v1522, %v1538
        %v1545 = vadd.f32 %v1523, %v1539
        %s1546 = sld [smem:[#allocation3 + $0x4a]]
        %v1547 = vstv %s1546
        %v1548 = vmul.f32 %v1547, %v187
        %v1549 = vmul.f32 %v1547, %v188
        %v1550 = vmul.f32 %v1547, 0.0
        %1554 = vrot.lane.b32.xlu0 %v1548, 80
        %v1555 = vpop.permute.xlu0 %1554
        %1556 = vrot.lane.b32.xlu0 %v1549, 80
        %v1557 = vpop.permute.xlu0 %1556
        %1558 = vrot.lane.b32.xlu0 %v1550, 80
        %v1559 = vpop.permute.xlu0 %1558
        %v1560 = vsel %vm331, %v1555, %v1557
        %v1561 = vsel %vm331, %v1557, %v1559
        %v1565 = vadd.f32 %v1543, %v1555
        %v1566 = vadd.f32 %v1544, %v1560
        %v1567 = vadd.f32 %v1545, %v1561
        %s1568 = sld [smem:[#allocation3 + $0x20]]
        %v1569 = vstv %s1568
        %v1570 = vmul.f32 %v1569, %v160
        %v1571 = vmul.f32 %v1569, %v167
        %v1572 = vmul.f32 %v1569, 0.0
        %1576 = vrot.lane.b32.xlu0 %v1570, 64
        %v1577 = vpop.permute.xlu0 %1576
        %1578 = vrot.lane.b32.xlu0 %v1571, 64
        %v1579 = vpop.permute.xlu0 %1578
        %1580 = vrot.lane.b32.xlu0 %v1572, 64
        %v1581 = vpop.permute.xlu0 %1580
        %v1582 = vsel %vm376, %v1577, %v1579
        %v1583 = vsel %vm376, %v1579, %v1581
        %v1587 = vadd.f32 %v1565, %v1577
        %v1588 = vadd.f32 %v1566, %v1582
        %v1589 = vadd.f32 %v1567, %v1583
        %s1590 = sld [smem:[#allocation3 + $0x51]]
        %v1591 = vstv %s1590
        %v1592 = vmul.f32 %v1591, %v187
        %v1593 = vmul.f32 %v1591, %v188
        %v1594 = vmul.f32 %v1591, 0.0
        %1598 = vrot.lane.b32.xlu0 %v1592, 64
        %v1599 = vpop.permute.xlu0 %1598
        %1600 = vrot.lane.b32.xlu0 %v1593, 64
        %v1601 = vpop.permute.xlu0 %1600
        %1602 = vrot.lane.b32.xlu0 %v1594, 64
        %v1603 = vpop.permute.xlu0 %1602
        %v1604 = vsel %vm376, %v1599, %v1601
        %v1605 = vsel %vm376, %v1601, %v1603
        %v1609 = vadd.f32 %v1587, %v1599
        %v1610 = vadd.f32 %v1588, %v1604
        %v1611 = vadd.f32 %v1589, %v1605
        %s1612 = sld [smem:[#allocation3 + $0x27]]
        %v1613 = vstv %s1612
        %v1614 = vmul.f32 %v1613, %v160
        %v1615 = vmul.f32 %v1613, %v167
        %v1616 = vmul.f32 %v1613, 0.0
        %1620 = vrot.lane.b32.xlu0 %v1614, 48
        %v1621 = vpop.permute.xlu0 %1620
        %1622 = vrot.lane.b32.xlu0 %v1615, 48
        %v1623 = vpop.permute.xlu0 %1622
        %1624 = vrot.lane.b32.xlu0 %v1616, 48
        %v1625 = vpop.permute.xlu0 %1624
        %v1626 = vsel %vm421, %v1621, %v1623
        %v1627 = vsel %vm421, %v1623, %v1625
        %v1631 = vadd.f32 %v1609, %v1621
        %v1632 = vadd.f32 %v1610, %v1626
        %v1633 = vadd.f32 %v1611, %v1627
        %s1634 = sld [smem:[#allocation3 + $0x58]]
        %v1635 = vstv %s1634
        %v1636 = vmul.f32 %v1635, %v187
        %v1637 = vmul.f32 %v1635, %v188
        %v1638 = vmul.f32 %v1635, 0.0
        %1642 = vrot.lane.b32.xlu0 %v1636, 48
        %v1643 = vpop.permute.xlu0 %1642
        %1644 = vrot.lane.b32.xlu0 %v1637, 48
        %v1645 = vpop.permute.xlu0 %1644
        %1646 = vrot.lane.b32.xlu0 %v1638, 48
        %v1647 = vpop.permute.xlu0 %1646
        %v1648 = vsel %vm421, %v1643, %v1645
        %v1649 = vsel %vm421, %v1645, %v1647
        %v1653 = vadd.f32 %v1631, %v1643
        %v1654 = vadd.f32 %v1632, %v1648
        %v1655 = vadd.f32 %v1633, %v1649
        %s1656 = sld [smem:[#allocation3 + $0x2e]]
        %v1657 = vstv %s1656
        %v1658 = vmul.f32 %v1657, %v160
        %v1659 = vmul.f32 %v1657, %v167
        %v1660 = vmul.f32 %v1657, 0.0
        %1664 = vrot.lane.b32.xlu0 %v1658, 32
        %v1665 = vpop.permute.xlu0 %1664
        %1666 = vrot.lane.b32.xlu0 %v1659, 32
        %v1667 = vpop.permute.xlu0 %1666
        %1668 = vrot.lane.b32.xlu0 %v1660, 32
        %v1669 = vpop.permute.xlu0 %1668
        %v1670 = vsel %vm466, %v1665, %v1667
        %v1671 = vsel %vm466, %v1667, %v1669
        %v1675 = vadd.f32 %v1653, %v1665
        %v1676 = vadd.f32 %v1654, %v1670
        %v1677 = vadd.f32 %v1655, %v1671
        %s1678 = sld [smem:[#allocation3 + $0x5f]]
        %v1679 = vstv %s1678
        %v1680 = vmul.f32 %v1679, %v187
        %v1681 = vmul.f32 %v1679, %v188
        %v1682 = vmul.f32 %v1679, 0.0
        %1686 = vrot.lane.b32.xlu0 %v1680, 32
        %v1687 = vpop.permute.xlu0 %1686
        %1688 = vrot.lane.b32.xlu0 %v1681, 32
        %v1689 = vpop.permute.xlu0 %1688
        %1690 = vrot.lane.b32.xlu0 %v1682, 32
        %v1691 = vpop.permute.xlu0 %1690
        %v1692 = vsel %vm466, %v1687, %v1689
        %v1693 = vsel %vm466, %v1689, %v1691
        %v1697 = vadd.f32 %v1675, %v1687
        %v1698 = vadd.f32 %v1676, %v1692
        %v1699 = vadd.f32 %v1677, %v1693
        %v1700 = vadd.f32 %v207, 1.0
        %v1701 = vadd.f32 %v208, 1.0
        %vm1702 = vcmp.ge.f32.partialorder %v1700, 0.0
        %vm1703 = vcmp.ge.f32.partialorder %v1701, 0.0
        %vm1704 = vcmp.lt.f32.partialorder %v1700, 16.0
        %vm1705 = vcmp.lt.f32.partialorder %v1701, 16.0
        %vm1706 = vmand %vm1702, %vm1704
        %vm1707 = vmand %vm1703, %vm1705
        %1711 = vrot.lane.b32.xlu0 %v1697, 47
        %v1712 = vpop.permute.xlu0 %1711
        %1713 = vrot.lane.b32.xlu0 %v1698, 47
        %v1714 = vpop.permute.xlu0 %1713
        %1715 = vrot.lane.b32.xlu0 %v1699, 47
        %v1716 = vpop.permute.xlu0 %1715
        %vm1717 = vcmask 384000
        %v1718 = vsel %vm1717, %v1712, %v1714
        %v1719 = vsel %vm1717, %v1714, %v1716
        %v1722 = vsel %vm1706, %v1718, 0.0
        %v1723 = vsel %vm1707, %v1719, 0.0
        %v1724 = vadd.f32 %v1418, %v1722
        %v1725 = vadd.f32 %v1419, %v1723
        %s1726 = sld [smem:[#allocation3 + $0x5]]
        %v1727 = vstv %s1726
        %v1728 = vmul.f32 %v1727, 0.0
        %v1729 = vmul.f32 %v1727, %v160
        %v1730 = vmul.f32 %v1727, %v167
        %v1731 = vadd.f32 %v1728, 0.0
        %v1732 = vadd.f32 %v1729, 0.0
        %v1733 = vadd.f32 %v1730, 0.0
        %s1734 = sld [smem:[#allocation3 + $0x36]]
        %v1735 = vstv %s1734
        %v1736 = vmul.f32 %v1735, 0.0
        %v1737 = vmul.f32 %v1735, %v187
        %v1738 = vmul.f32 %v1735, %v188
        %v1739 = vadd.f32 %v1731, %v1736
        %v1740 = vadd.f32 %v1732, %v1737
        %v1741 = vadd.f32 %v1733, %v1738
        %s1742 = sld [smem:[#allocation3 + $0xc]]
        %v1743 = vstv %s1742
        %v1744 = vmul.f32 %v1743, 0.0
        %v1745 = vmul.f32 %v1743, %v160
        %v1746 = vmul.f32 %v1743, %v167
        %1750 = vrot.lane.b32.xlu0 %v1744, 112
        %v1751 = vpop.permute.xlu0 %1750
        %1752 = vrot.lane.b32.xlu0 %v1745, 112
        %v1753 = vpop.permute.xlu0 %1752
        %1754 = vrot.lane.b32.xlu0 %v1746, 112
        %v1755 = vpop.permute.xlu0 %1754
        %v1756 = vsel %vm241, %v1751, %v1753
        %v1757 = vsel %vm241, %v1753, %v1755
        %v1761 = vadd.f32 %v1739, %v1756
        %v1762 = vadd.f32 %v1740, %v1757
        %v1763 = vadd.f32 %v1741, %v1755
        %s1764 = sld [smem:[#allocation3 + $0x3d]]
        %v1765 = vstv %s1764
        %v1766 = vmul.f32 %v1765, 0.0
        %v1767 = vmul.f32 %v1765, %v187
        %v1768 = vmul.f32 %v1765, %v188
        %1772 = vrot.lane.b32.xlu0 %v1766, 112
        %v1773 = vpop.permute.xlu0 %1772
        %1774 = vrot.lane.b32.xlu0 %v1767, 112
        %v1775 = vpop.permute.xlu0 %1774
        %1776 = vrot.lane.b32.xlu0 %v1768, 112
        %v1777 = vpop.permute.xlu0 %1776
        %v1778 = vsel %vm241, %v1773, %v1775
        %v1779 = vsel %vm241, %v1775, %v1777
        %v1783 = vadd.f32 %v1761, %v1778
        %v1784 = vadd.f32 %v1762, %v1779
        %v1785 = vadd.f32 %v1763, %v1777
        %s1786 = sld [smem:[#allocation3 + $0x13]]
        %v1787 = vstv %s1786
        %v1788 = vmul.f32 %v1787, 0.0
        %v1789 = vmul.f32 %v1787, %v160
        %v1790 = vmul.f32 %v1787, %v167
        %1794 = vrot.lane.b32.xlu0 %v1788, 96
        %v1795 = vpop.permute.xlu0 %1794
        %1796 = vrot.lane.b32.xlu0 %v1789, 96
        %v1797 = vpop.permute.xlu0 %1796
        %1798 = vrot.lane.b32.xlu0 %v1790, 96
        %v1799 = vpop.permute.xlu0 %1798
        %v1800 = vsel %vm286, %v1795, %v1797
        %v1801 = vsel %vm286, %v1797, %v1799
        %v1805 = vadd.f32 %v1783, %v1800
        %v1806 = vadd.f32 %v1784, %v1801
        %v1807 = vadd.f32 %v1785, %v1799
        %s1808 = sld [smem:[#allocation3 + $0x44]]
        %v1809 = vstv %s1808
        %v1810 = vmul.f32 %v1809, 0.0
        %v1811 = vmul.f32 %v1809, %v187
        %v1812 = vmul.f32 %v1809, %v188
        %1816 = vrot.lane.b32.xlu0 %v1810, 96
        %v1817 = vpop.permute.xlu0 %1816
        %1818 = vrot.lane.b32.xlu0 %v1811, 96
        %v1819 = vpop.permute.xlu0 %1818
        %1820 = vrot.lane.b32.xlu0 %v1812, 96
        %v1821 = vpop.permute.xlu0 %1820
        %v1822 = vsel %vm286, %v1817, %v1819
        %v1823 = vsel %vm286, %v1819, %v1821
        %v1827 = vadd.f32 %v1805, %v1822
        %v1828 = vadd.f32 %v1806, %v1823
        %v1829 = vadd.f32 %v1807, %v1821
        %s1830 = sld [smem:[#allocation3 + $0x1a]]
        %v1831 = vstv %s1830
        %v1832 = vmul.f32 %v1831, %v160
        %v1833 = vmul.f32 %v1831, %v167
        %v1834 = vmul.f32 %v1831, 0.0
        %1838 = vrot.lane.b32.xlu0 %v1832, 80
        %v1839 = vpop.permute.xlu0 %1838
        %1840 = vrot.lane.b32.xlu0 %v1833, 80
        %v1841 = vpop.permute.xlu0 %1840
        %1842 = vrot.lane.b32.xlu0 %v1834, 80
        %v1843 = vpop.permute.xlu0 %1842
        %v1844 = vsel %vm331, %v1839, %v1841
        %v1845 = vsel %vm331, %v1841, %v1843
        %v1849 = vadd.f32 %v1827, %v1839
        %v1850 = vadd.f32 %v1828, %v1844
        %v1851 = vadd.f32 %v1829, %v1845
        %s1852 = sld [smem:[#allocation3 + $0x4b]]
        %v1853 = vstv %s1852
        %v1854 = vmul.f32 %v1853, %v187
        %v1855 = vmul.f32 %v1853, %v188
        %v1856 = vmul.f32 %v1853, 0.0
        %1860 = vrot.lane.b32.xlu0 %v1854, 80
        %v1861 = vpop.permute.xlu0 %1860
        %1862 = vrot.lane.b32.xlu0 %v1855, 80
        %v1863 = vpop.permute.xlu0 %1862
        %1864 = vrot.lane.b32.xlu0 %v1856, 80
        %v1865 = vpop.permute.xlu0 %1864
        %v1866 = vsel %vm331, %v1861, %v1863
        %v1867 = vsel %vm331, %v1863, %v1865
        %v1871 = vadd.f32 %v1849, %v1861
        %v1872 = vadd.f32 %v1850, %v1866
        %v1873 = vadd.f32 %v1851, %v1867
        %s1874 = sld [smem:[#allocation3 + $0x21]]
        %v1875 = vstv %s1874
        %v1876 = vmul.f32 %v1875, %v160
        %v1877 = vmul.f32 %v1875, %v167
        %v1878 = vmul.f32 %v1875, 0.0
        %1882 = vrot.lane.b32.xlu0 %v1876, 64
        %v1883 = vpop.permute.xlu0 %1882
        %1884 = vrot.lane.b32.xlu0 %v1877, 64
        %v1885 = vpop.permute.xlu0 %1884
        %1886 = vrot.lane.b32.xlu0 %v1878, 64
        %v1887 = vpop.permute.xlu0 %1886
        %v1888 = vsel %vm376, %v1883, %v1885
        %v1889 = vsel %vm376, %v1885, %v1887
        %v1893 = vadd.f32 %v1871, %v1883
        %v1894 = vadd.f32 %v1872, %v1888
        %v1895 = vadd.f32 %v1873, %v1889
        %s1896 = sld [smem:[#allocation3 + $0x52]]
        %v1897 = vstv %s1896
        %v1898 = vmul.f32 %v1897, %v187
        %v1899 = vmul.f32 %v1897, %v188
        %v1900 = vmul.f32 %v1897, 0.0
        %1904 = vrot.lane.b32.xlu0 %v1898, 64
        %v1905 = vpop.permute.xlu0 %1904
        %1906 = vrot.lane.b32.xlu0 %v1899, 64
        %v1907 = vpop.permute.xlu0 %1906
        %1908 = vrot.lane.b32.xlu0 %v1900, 64
        %v1909 = vpop.permute.xlu0 %1908
        %v1910 = vsel %vm376, %v1905, %v1907
        %v1911 = vsel %vm376, %v1907, %v1909
        %v1915 = vadd.f32 %v1893, %v1905
        %v1916 = vadd.f32 %v1894, %v1910
        %v1917 = vadd.f32 %v1895, %v1911
        %s1918 = sld [smem:[#allocation3 + $0x28]]
        %v1919 = vstv %s1918
        %v1920 = vmul.f32 %v1919, %v160
        %v1921 = vmul.f32 %v1919, %v167
        %v1922 = vmul.f32 %v1919, 0.0
        %1926 = vrot.lane.b32.xlu0 %v1920, 48
        %v1927 = vpop.permute.xlu0 %1926
        %1928 = vrot.lane.b32.xlu0 %v1921, 48
        %v1929 = vpop.permute.xlu0 %1928
        %1930 = vrot.lane.b32.xlu0 %v1922, 48
        %v1931 = vpop.permute.xlu0 %1930
        %v1932 = vsel %vm421, %v1927, %v1929
        %v1933 = vsel %vm421, %v1929, %v1931
        %v1937 = vadd.f32 %v1915, %v1927
        %v1938 = vadd.f32 %v1916, %v1932
        %v1939 = vadd.f32 %v1917, %v1933
        %s1940 = sld [smem:[#allocation3 + $0x59]]
        %v1941 = vstv %s1940
        %v1942 = vmul.f32 %v1941, %v187
        %v1943 = vmul.f32 %v1941, %v188
        %v1944 = vmul.f32 %v1941, 0.0
        %1948 = vrot.lane.b32.xlu0 %v1942, 48
        %v1949 = vpop.permute.xlu0 %1948
        %1950 = vrot.lane.b32.xlu0 %v1943, 48
        %v1951 = vpop.permute.xlu0 %1950
        %1952 = vrot.lane.b32.xlu0 %v1944, 48
        %v1953 = vpop.permute.xlu0 %1952
        %v1954 = vsel %vm421, %v1949, %v1951
        %v1955 = vsel %vm421, %v1951, %v1953
        %v1959 = vadd.f32 %v1937, %v1949
        %v1960 = vadd.f32 %v1938, %v1954
        %v1961 = vadd.f32 %v1939, %v1955
        %s1962 = sld [smem:[#allocation3 + $0x2f]]
        %v1963 = vstv %s1962
        %v1964 = vmul.f32 %v1963, %v160
        %v1965 = vmul.f32 %v1963, %v167
        %v1966 = vmul.f32 %v1963, 0.0
        %1970 = vrot.lane.b32.xlu0 %v1964, 32
        %v1971 = vpop.permute.xlu0 %1970
        %1972 = vrot.lane.b32.xlu0 %v1965, 32
        %v1973 = vpop.permute.xlu0 %1972
        %1974 = vrot.lane.b32.xlu0 %v1966, 32
        %v1975 = vpop.permute.xlu0 %1974
        %v1976 = vsel %vm466, %v1971, %v1973
        %v1977 = vsel %vm466, %v1973, %v1975
        %v1981 = vadd.f32 %v1959, %v1971
        %v1982 = vadd.f32 %v1960, %v1976
        %v1983 = vadd.f32 %v1961, %v1977
        %s1984 = sld [smem:[#allocation3 + $0x60]]
        %v1985 = vstv %s1984
        %v1986 = vmul.f32 %v1985, %v187
        %v1987 = vmul.f32 %v1985, %v188
        %v1988 = vmul.f32 %v1985, 0.0
        %1992 = vrot.lane.b32.xlu0 %v1986, 32
        %v1993 = vpop.permute.xlu0 %1992
        %1994 = vrot.lane.b32.xlu0 %v1987, 32
        %v1995 = vpop.permute.xlu0 %1994
        %1996 = vrot.lane.b32.xlu0 %v1988, 32
        %v1997 = vpop.permute.xlu0 %1996
        %v1998 = vsel %vm466, %v1993, %v1995
        %v1999 = vsel %vm466, %v1995, %v1997
        %v2003 = vadd.f32 %v1981, %v1993
        %v2004 = vadd.f32 %v1982, %v1998
        %v2005 = vadd.f32 %v1983, %v1999
        %v2006 = vadd.f32 %v207, 2.0
        %v2007 = vadd.f32 %v208, 2.0
        %vm2008 = vcmp.ge.f32.partialorder %v2006, 0.0
        %vm2009 = vcmp.ge.f32.partialorder %v2007, 0.0
        %vm2010 = vcmp.lt.f32.partialorder %v2006, 16.0
        %vm2011 = vcmp.lt.f32.partialorder %v2007, 16.0
        %vm2012 = vmand %vm2008, %vm2010
        %vm2013 = vmand %vm2009, %vm2011
        %2017 = vrot.lane.b32.xlu0 %v2003, 46
        %v2018 = vpop.permute.xlu0 %2017
        %2019 = vrot.lane.b32.xlu0 %v2004, 46
        %v2020 = vpop.permute.xlu0 %2019
        %2021 = vrot.lane.b32.xlu0 %v2005, 46
        %v2022 = vpop.permute.xlu0 %2021
        %vm2023 = vcmask 375808
        %v2024 = vsel %vm2023, %v2018, %v2020
        %v2025 = vsel %vm2023, %v2020, %v2022
        %v2028 = vsel %vm2012, %v2024, 0.0
        %v2029 = vsel %vm2013, %v2025, 0.0
        %v2030 = vadd.f32 %v1724, %v2028
        %v2031 = vadd.f32 %v1725, %v2029
        %s2032 = sld [smem:[#allocation3 + $0x6]]
        %v2033 = vstv %s2032
        %v2034 = vmul.f32 %v2033, 0.0
        %v2035 = vmul.f32 %v2033, %v160
        %v2036 = vmul.f32 %v2033, %v167
        %v2037 = vadd.f32 %v2034, 0.0
        %v2038 = vadd.f32 %v2035, 0.0
        %v2039 = vadd.f32 %v2036, 0.0
        %s2040 = sld [smem:[#allocation3 + $0x37]]
        %v2041 = vstv %s2040
        %v2042 = vmul.f32 %v2041, 0.0
        %v2043 = vmul.f32 %v2041, %v187
        %v2044 = vmul.f32 %v2041, %v188
        %v2045 = vadd.f32 %v2037, %v2042
        %v2046 = vadd.f32 %v2038, %v2043
        %v2047 = vadd.f32 %v2039, %v2044
        %s2048 = sld [smem:[#allocation3 + $0xd]]
        %v2049 = vstv %s2048
        %v2050 = vmul.f32 %v2049, 0.0
        %v2051 = vmul.f32 %v2049, %v160
        %v2052 = vmul.f32 %v2049, %v167
        %2056 = vrot.lane.b32.xlu0 %v2050, 112
        %v2057 = vpop.permute.xlu0 %2056
        %2058 = vrot.lane.b32.xlu0 %v2051, 112
        %v2059 = vpop.permute.xlu0 %2058
        %2060 = vrot.lane.b32.xlu0 %v2052, 112
        %v2061 = vpop.permute.xlu0 %2060
        %v2062 = vsel %vm241, %v2057, %v2059
        %v2063 = vsel %vm241, %v2059, %v2061
        %v2067 = vadd.f32 %v2045, %v2062
        %v2068 = vadd.f32 %v2046, %v2063
        %v2069 = vadd.f32 %v2047, %v2061
        %s2070 = sld [smem:[#allocation3 + $0x3e]]
        %v2071 = vstv %s2070
        %v2072 = vmul.f32 %v2071, 0.0
        %v2073 = vmul.f32 %v2071, %v187
        %v2074 = vmul.f32 %v2071, %v188
        %2078 = vrot.lane.b32.xlu0 %v2072, 112
        %v2079 = vpop.permute.xlu0 %2078
        %2080 = vrot.lane.b32.xlu0 %v2073, 112
        %v2081 = vpop.permute.xlu0 %2080
        %2082 = vrot.lane.b32.xlu0 %v2074, 112
        %v2083 = vpop.permute.xlu0 %2082
        %v2084 = vsel %vm241, %v2079, %v2081
        %v2085 = vsel %vm241, %v2081, %v2083
        %v2089 = vadd.f32 %v2067, %v2084
        %v2090 = vadd.f32 %v2068, %v2085
        %v2091 = vadd.f32 %v2069, %v2083
        %s2092 = sld [smem:[#allocation3 + $0x14]]
        %v2093 = vstv %s2092
        %v2094 = vmul.f32 %v2093, 0.0
        %v2095 = vmul.f32 %v2093, %v160
        %v2096 = vmul.f32 %v2093, %v167
        %2100 = vrot.lane.b32.xlu0 %v2094, 96
        %v2101 = vpop.permute.xlu0 %2100
        %2102 = vrot.lane.b32.xlu0 %v2095, 96
        %v2103 = vpop.permute.xlu0 %2102
        %2104 = vrot.lane.b32.xlu0 %v2096, 96
        %v2105 = vpop.permute.xlu0 %2104
        %v2106 = vsel %vm286, %v2101, %v2103
        %v2107 = vsel %vm286, %v2103, %v2105
        %v2111 = vadd.f32 %v2089, %v2106
        %v2112 = vadd.f32 %v2090, %v2107
        %v2113 = vadd.f32 %v2091, %v2105
        %s2114 = sld [smem:[#allocation3 + $0x45]]
        %v2115 = vstv %s2114
        %v2116 = vmul.f32 %v2115, 0.0
        %v2117 = vmul.f32 %v2115, %v187
        %v2118 = vmul.f32 %v2115, %v188
        %2122 = vrot.lane.b32.xlu0 %v2116, 96
        %v2123 = vpop.permute.xlu0 %2122
        %2124 = vrot.lane.b32.xlu0 %v2117, 96
        %v2125 = vpop.permute.xlu0 %2124
        %2126 = vrot.lane.b32.xlu0 %v2118, 96
        %v2127 = vpop.permute.xlu0 %2126
        %v2128 = vsel %vm286, %v2123, %v2125
        %v2129 = vsel %vm286, %v2125, %v2127
        %v2133 = vadd.f32 %v2111, %v2128
        %v2134 = vadd.f32 %v2112, %v2129
        %v2135 = vadd.f32 %v2113, %v2127
        %s2136 = sld [smem:[#allocation3 + $0x1b]]
        %v2137 = vstv %s2136
        %v2138 = vmul.f32 %v2137, %v160
        %v2139 = vmul.f32 %v2137, %v167
        %v2140 = vmul.f32 %v2137, 0.0
        %2144 = vrot.lane.b32.xlu0 %v2138, 80
        %v2145 = vpop.permute.xlu0 %2144
        %2146 = vrot.lane.b32.xlu0 %v2139, 80
        %v2147 = vpop.permute.xlu0 %2146
        %2148 = vrot.lane.b32.xlu0 %v2140, 80
        %v2149 = vpop.permute.xlu0 %2148
        %v2150 = vsel %vm331, %v2145, %v2147
        %v2151 = vsel %vm331, %v2147, %v2149
        %v2155 = vadd.f32 %v2133, %v2145
        %v2156 = vadd.f32 %v2134, %v2150
        %v2157 = vadd.f32 %v2135, %v2151
        %s2158 = sld [smem:[#allocation3 + $0x4c]]
        %v2159 = vstv %s2158
        %v2160 = vmul.f32 %v2159, %v187
        %v2161 = vmul.f32 %v2159, %v188
        %v2162 = vmul.f32 %v2159, 0.0
        %2166 = vrot.lane.b32.xlu0 %v2160, 80
        %v2167 = vpop.permute.xlu0 %2166
        %2168 = vrot.lane.b32.xlu0 %v2161, 80
        %v2169 = vpop.permute.xlu0 %2168
        %2170 = vrot.lane.b32.xlu0 %v2162, 80
        %v2171 = vpop.permute.xlu0 %2170
        %v2172 = vsel %vm331, %v2167, %v2169
        %v2173 = vsel %vm331, %v2169, %v2171
        %v2177 = vadd.f32 %v2155, %v2167
        %v2178 = vadd.f32 %v2156, %v2172
        %v2179 = vadd.f32 %v2157, %v2173
        %s2180 = sld [smem:[#allocation3 + $0x22]]
        %v2181 = vstv %s2180
        %v2182 = vmul.f32 %v2181, %v160
        %v2183 = vmul.f32 %v2181, %v167
        %v2184 = vmul.f32 %v2181, 0.0
        %2188 = vrot.lane.b32.xlu0 %v2182, 64
        %v2189 = vpop.permute.xlu0 %2188
        %2190 = vrot.lane.b32.xlu0 %v2183, 64
        %v2191 = vpop.permute.xlu0 %2190
        %2192 = vrot.lane.b32.xlu0 %v2184, 64
        %v2193 = vpop.permute.xlu0 %2192
        %v2194 = vsel %vm376, %v2189, %v2191
        %v2195 = vsel %vm376, %v2191, %v2193
        %v2199 = vadd.f32 %v2177, %v2189
        %v2200 = vadd.f32 %v2178, %v2194
        %v2201 = vadd.f32 %v2179, %v2195
        %s2202 = sld [smem:[#allocation3 + $0x53]]
        %v2203 = vstv %s2202
        %v2204 = vmul.f32 %v2203, %v187
        %v2205 = vmul.f32 %v2203, %v188
        %v2206 = vmul.f32 %v2203, 0.0
        %2210 = vrot.lane.b32.xlu0 %v2204, 64
        %v2211 = vpop.permute.xlu0 %2210
        %2212 = vrot.lane.b32.xlu0 %v2205, 64
        %v2213 = vpop.permute.xlu0 %2212
        %2214 = vrot.lane.b32.xlu0 %v2206, 64
        %v2215 = vpop.permute.xlu0 %2214
        %v2216 = vsel %vm376, %v2211, %v2213
        %v2217 = vsel %vm376, %v2213, %v2215
        %v2221 = vadd.f32 %v2199, %v2211
        %v2222 = vadd.f32 %v2200, %v2216
        %v2223 = vadd.f32 %v2201, %v2217
        %s2224 = sld [smem:[#allocation3 + $0x29]]
        %v2225 = vstv %s2224
        %v2226 = vmul.f32 %v2225, %v160
        %v2227 = vmul.f32 %v2225, %v167
        %v2228 = vmul.f32 %v2225, 0.0
        %2232 = vrot.lane.b32.xlu0 %v2226, 48
        %v2233 = vpop.permute.xlu0 %2232
        %2234 = vrot.lane.b32.xlu0 %v2227, 48
        %v2235 = vpop.permute.xlu0 %2234
        %2236 = vrot.lane.b32.xlu0 %v2228, 48
        %v2237 = vpop.permute.xlu0 %2236
        %v2238 = vsel %vm421, %v2233, %v2235
        %v2239 = vsel %vm421, %v2235, %v2237
        %v2243 = vadd.f32 %v2221, %v2233
        %v2244 = vadd.f32 %v2222, %v2238
        %v2245 = vadd.f32 %v2223, %v2239
        %s2246 = sld [smem:[#allocation3 + $0x5a]]
        %v2247 = vstv %s2246
        %v2248 = vmul.f32 %v2247, %v187
        %v2249 = vmul.f32 %v2247, %v188
        %v2250 = vmul.f32 %v2247, 0.0
        %2254 = vrot.lane.b32.xlu0 %v2248, 48
        %v2255 = vpop.permute.xlu0 %2254
        %2256 = vrot.lane.b32.xlu0 %v2249, 48
        %v2257 = vpop.permute.xlu0 %2256
        %2258 = vrot.lane.b32.xlu0 %v2250, 48
        %v2259 = vpop.permute.xlu0 %2258
        %v2260 = vsel %vm421, %v2255, %v2257
        %v2261 = vsel %vm421, %v2257, %v2259
        %v2265 = vadd.f32 %v2243, %v2255
        %v2266 = vadd.f32 %v2244, %v2260
        %v2267 = vadd.f32 %v2245, %v2261
        %s2268 = sld [smem:[#allocation3 + $0x30]]
        %v2269 = vstv %s2268
        %v2270 = vmul.f32 %v2269, %v160
        %v2271 = vmul.f32 %v2269, %v167
        %v2272 = vmul.f32 %v2269, 0.0
        %2276 = vrot.lane.b32.xlu0 %v2270, 32
        %v2277 = vpop.permute.xlu0 %2276
        %2278 = vrot.lane.b32.xlu0 %v2271, 32
        %v2279 = vpop.permute.xlu0 %2278
        %2280 = vrot.lane.b32.xlu0 %v2272, 32
        %v2281 = vpop.permute.xlu0 %2280
        %v2282 = vsel %vm466, %v2277, %v2279
        %v2283 = vsel %vm466, %v2279, %v2281
        %v2287 = vadd.f32 %v2265, %v2277
        %v2288 = vadd.f32 %v2266, %v2282
        %v2289 = vadd.f32 %v2267, %v2283
        %s2290 = sld [smem:[#allocation3 + $0x61]]
        %v2291 = vstv %s2290
        %v2292 = vmul.f32 %v2291, %v187
        %v2293 = vmul.f32 %v2291, %v188
        %v2294 = vmul.f32 %v2291, 0.0
        %2298 = vrot.lane.b32.xlu0 %v2292, 32
        %v2299 = vpop.permute.xlu0 %2298
        %2300 = vrot.lane.b32.xlu0 %v2293, 32
        %v2301 = vpop.permute.xlu0 %2300
        %2302 = vrot.lane.b32.xlu0 %v2294, 32
        %v2303 = vpop.permute.xlu0 %2302
        %v2304 = vsel %vm466, %v2299, %v2301
        %v2305 = vsel %vm466, %v2301, %v2303
        %v2309 = vadd.f32 %v2287, %v2299
        %v2310 = vadd.f32 %v2288, %v2304
        %v2311 = vadd.f32 %v2289, %v2305
        %v2312 = vadd.f32 %v207, 3.0
        %v2313 = vadd.f32 %v208, 3.0
        %vm2314 = vcmp.ge.f32.partialorder %v2312, 0.0
        %vm2315 = vcmp.ge.f32.partialorder %v2313, 0.0
        %vm2316 = vcmp.lt.f32.partialorder %v2312, 16.0
        %vm2317 = vcmp.lt.f32.partialorder %v2313, 16.0
        %vm2318 = vmand %vm2314, %vm2316
        %vm2319 = vmand %vm2315, %vm2317
        %2323 = vrot.lane.b32.xlu0 %v2309, 45
        %v2324 = vpop.permute.xlu0 %2323
        %2325 = vrot.lane.b32.xlu0 %v2310, 45
        %v2326 = vpop.permute.xlu0 %2325
        %2327 = vrot.lane.b32.xlu0 %v2311, 45
        %v2328 = vpop.permute.xlu0 %2327
        %vm2329 = vcmask 367616
        %v2330 = vsel %vm2329, %v2324, %v2326
        %v2331 = vsel %vm2329, %v2326, %v2328
        %v2334 = vsel %vm2318, %v2330, 0.0
        %v2335 = vsel %vm2319, %v2331, 0.0
        %v2336 = vadd.f32 %v2030, %v2334
        %v2337 = vadd.f32 %v2031, %v2335
        %v2338 = vxor.u32 %v2336, 2147483648
        %v2339 = vxor.u32 %v2337, 2147483648
        %v2340 = vmul.f32 %v2338, 1.442695
        %v2341 = vpow.pop %v2340
        %v2342 = vmul.f32 %v2339, 1.442695
        %v2343 = vpow.pop %v2342
        %v2344 = vadd.f32 %v2341, 1.0
        %v2345 = vadd.f32 %v2343, 1.0
        %v2346 = vrcp.pop %v2344
        %v2347 = vmul.f32 %v2344, %v2346
        %v2348 = vsub.f32 1.0, %v2347
        %v2349 = vmul.f32 %v2346, %v2348
        %v2350 = vadd.f32 %v2346, %v2349
        %vm2351 = vweird.f32 %v2344
        %vm2352 = vweird.f32 %v2346
        %vm2353 = vmor %vm2351, %vm2352
        %v2354 = vsel %vm2353, %v2346, %v2350
        %v2355 = vand.u32 2147483647, %v2344
        %vm2356 = vcmp.eq.f32.partialorder %v2355, 8.507059e+37
        %v2357 = vand.u32 %v2344, 2147483648
        %v2358 = vor.u32 1.1754944e-38, %v2357
        %v2359 = vsel %vm2356, %v2358, %v2354
        %v2360 = vmul.f32 1.0, %v2359
        %v2361 = vrcp.pop %v2345
        %v2362 = vmul.f32 %v2345, %v2361
        %v2363 = vsub.f32 1.0, %v2362
        %v2364 = vmul.f32 %v2361, %v2363
        %v2365 = vadd.f32 %v2361, %v2364
        %vm2366 = vweird.f32 %v2345
        %vm2367 = vweird.f32 %v2361
        %vm2368 = vmor %vm2366, %vm2367
        %v2369 = vsel %vm2368, %v2361, %v2365
        %v2370 = vand.u32 2147483647, %v2345
        %vm2371 = vcmp.eq.f32.partialorder %v2370, 8.507059e+37
        %v2372 = vand.u32 %v2345, 2147483648
        %v2373 = vor.u32 1.1754944e-38, %v2372
        %v2374 = vsel %vm2371, %v2373, %v2369
        %v2375 = vmul.f32 1.0, %v2374
        %v2376 = vperm.slane %v2360, 0
        %v2377 = vperm.slane %v2375, 0
        %v2380 = vrot.slane %v2377, 4
        %v2381 = vsel %vm153, %v2376, %v2380
        %v2383 = vmul.f32 %v146, %v2381
        %2384 = vst [vmem:[%s145] sm:$0xff] %v2383
        %s2385 = sand.u32 %s63, 1
        %s2386 = scalar_lea.sflag [#allocation7], %s2385
        %s2387 = sand.u32 %s63, 1
        %s2388 = smul.addr %s2387, 8
        %s2389 = scalar_lea.vmem [#allocation8], %s2388
        // Predicated region
        $region29: #{tpu_custom_call.1} parent=23 // pred_check
          %p2390 = pneg %p73
        $region30: #{tpu_custom_call.1} parent=23 // pred_check_branch
          %2392 = sbr.rel (%p2390) target = $region32
        $region31: #{tpu_custom_call.1} parent=23 // pred_region
          %2394 = vsyncadd %s2386, 0
          %s2395 = smul.addr %s29, 2
          %s2396 = smul.addr %s2395, 4
          %s2397 = scalar_lea.hbm %s3, %s2396
          %s2399 = sshll.u32 %s2389, 4
          %s2400 = int_to_ptr.vmem [resolvable:$true] %s2399
          %s2401 = sshll.u32 %s2397, 4
          %s2402 = int_to_ptr.hbm [resolvable:$true] %s2401
          %2404 = dma.vmem_to_hbm [thread:$0]  %s2400, 128, %s2402, %s2386
        $region32: #{tpu_custom_call.1} parent=23 // pred_fallthru
          _
      $region24: #{tpu_custom_call.1} parent=5 // pred_fallthru
        _
      %p2405 = scmp.le.s32.totalorder 2, %s24
      // Predicated region
      $region33: #{tpu_custom_call.1} parent=5 // pred_check
        %p2406 = pneg %p2405
      $region34: #{tpu_custom_call.1} parent=5 // pred_check_branch
        %2408 = sbr.rel (%p2406) target = $region36
      $region35: #{tpu_custom_call.1} parent=5 // pred_region
        %s2409 = ssub.s32 %s24, 2
        // Predicated region
        $region37: #{tpu_custom_call.1} parent=35 // pred_check
          %p2410 = pneg %p79
        $region38: #{tpu_custom_call.1} parent=35 // pred_check_branch
          %2412 = sbr.rel (%p2410) target = $region40
        $region39: #{tpu_custom_call.1} parent=35 // pred_region
          %s2413 = sand.u32 %s64, 1
          %s2414 = scalar_lea.sflag [#allocation7], %s2413
          %s2415 = sand.u32 %s64, 1
          %s2416 = smul.addr %s2415, 8
          %s2417 = scalar_lea.vmem [#allocation8], %s2416
          %2419 = dma.done %s2414, 128
        $region40: #{tpu_custom_call.1} parent=35 // pred_fallthru
          _
      $region36: #{tpu_custom_call.1} parent=5 // pred_fallthru
        _
    $region6: #{tpu_custom_call.1} parent=1 // loop_footer
      %s28 = sadd.s32 1, %s24
    $region7: #{tpu_custom_call.1} parent=1 // loop_footer_branch
      %23 = sbr.rel target = $region3
    $region8: #{tpu_custom_call.1} parent=1 // loop_exit
      _
    %2420 = vsyncpa [#allocation6], 1
    %s2421 = scalar_lea.sflag [#allocation6], 1
    %2422 = vsyncpa %s2421, 1
    %2423 = vsyncpa [#allocation7], 1
    %s2424 = scalar_lea.sflag [#allocation7], 1
    %2425 = vsyncpa %s2424, 1

</llo_original>
